<compile_context>
chip_gen: v7x
topology: tpu7x:2x2x1
jax: 0.10.0
libtpu: 0.0.40
codegen_flags: <defaults>
</compile_context>

<pallas_src>
import jax
import jax.numpy as jnp
from jax.experimental import pallas as pl
from jax.experimental.pallas import tpu as pltpu

K = 7          # kernel_size
P = 3          # padding (kernel_size == 7)


def _pick_tiles(N, C, HW):
    """Pick (Nb, Ct): batch elements per grid step and channel tile."""
    elem = 4  # f32 bytes
    # Channel tile: full C when one (1, C, HW) f32 block fits a ~4 MiB budget
    # (the pipeline double-buffers it), else the largest multiple-of-8 divisor
    # of C that fits (multiple-of-8 keeps the block sublane-aligned).
    ct_budget = 4 << 20
    ct = C
    if C * HW * elem > ct_budget:
        best = None
        for cand in range(8, C, 8):
            if C % cand == 0 and cand * HW * elem <= ct_budget:
                best = cand           # keep the largest fitting divisor
        if best is not None:
            ct = best
    # Batch tile: group a few images per grid step only when per-image work is
    # tiny, but keep >= 2 parallel grid steps so both v7x TensorCores stay busy.
    nb = 1
    if ct == C:
        for cand in range(2, min(N, 8) + 1):
            if N % cand == 0 and N // cand >= 2 and cand * C * HW * elem <= (1 << 20):
                nb = cand
    return nb, ct


def spatial_attention(x, w, *, nb=None, ct=None):
    """x: (N, C, H, W), w: (1, 2, K, K) OIHW conv weight -> (N, 1, H, W)."""
    N, C, H, W = x.shape
    HW = H * W
    OFF = P * W + P                                   # max |flat shift| of a tap
    LPAD = ((OFF + 127) // 128) * 128                 # lane-aligned left margin
    HWP = ((LPAD + HW + OFF + 127) // 128) * 128      # lane-aligned padded length

    Nb_, Ct_ = _pick_tiles(N, C, HW)
    Nb = Nb_ if nb is None else nb
    Ct = Ct_ if ct is None else ct
    assert N % Nb == 0 and C % Ct == 0
    NC = C // Ct

    # Lane-dense view of x (free XLA reshape).
    x_flat = x.reshape(N, C, HW)

    # Fold 1/C of the channel mean into the avg-channel taps; flattening order
    # matches OIHW: [avg taps (49) | max taps (49)].
    w32 = w.astype(jnp.float32)
    w_scaled = w32 * jnp.array([1.0 / C, 1.0], jnp.float32)[None, :, None, None]
    w_flat = w_scaled.reshape(-1)                                   # (2*K*K,)

    # Per-kx column-validity masks for the flat-domain conv: tap kx reads
    # source column x + (kx - P); valid iff that lands in [0, W).
    col = jnp.arange(HW, dtype=jnp.int32) % W
    colmask = jnp.stack(
        [((col + (kx - P) >= 0) & (col + (kx - P) < W)).astype(jnp.float32)
         for kx in range(K)], axis=0)                               # (K, HW)

    def kernel(w_ref, m_ref, x_ref, o_ref, red_ref, pad_ref):
        # w_ref:   SMEM (2*K*K,)     scaled conv taps [avg | max]
        # m_ref:   VMEM (K, HW)      per-kx column masks
        # x_ref:   VMEM (Nb, Ct, HW) lane-dense input chunk
        # o_ref:   VMEM (Nb, 1, HW)  lane-dense sigmoid output
        # red_ref: VMEM (2*Nb, HW)   running [sum | max] over channel tiles
        # pad_ref: VMEM (2*Nb, HWP)  zero-margined flat pooled maps
        c = pl.program_id(1)
        last_c = pl.num_programs(1) - 1

        @pl.when(c == 0)
        def _init():
            for b in range(Nb):
                xb = x_ref[b].astype(jnp.float32)                  # (Ct, HW)
                red_ref[b:b + 1] = jnp.sum(xb, axis=0, keepdims=True)
                red_ref[Nb + b:Nb + b + 1] = jnp.max(xb, axis=0, keepdims=True)

        @pl.when(c > 0)
        def _accumulate():
            for b in range(Nb):
                xb = x_ref[b].astype(jnp.float32)
                red_ref[b:b + 1] = red_ref[b:b + 1] + jnp.sum(
                    xb, axis=0, keepdims=True)
                red_ref[Nb + b:Nb + b + 1] = jnp.maximum(
                    red_ref[Nb + b:Nb + b + 1],
                    jnp.max(xb, axis=0, keepdims=True))

        @pl.when(c == last_c)
        def _finalize():
            # Zero-margined flat pooled maps: rows [0:Nb) = sum, [Nb:2Nb) = max.
            pad_ref[...] = jnp.zeros_like(pad_ref)
            pad_ref[:, LPAD:LPAD + HW] = red_ref[...]

            # 7x7 conv in the flat domain: tap (ky, kx) is a constant shift by
            # (ky-P)*W + (kx-P); row overflow lands in the zero margins, column
            # wrap-around is killed by the per-kx mask (kx-dependent only, so
            # it is applied once per kx after the ky sum).
            acc = jnp.zeros((Nb, HW), jnp.float32)
            for kx in range(K):
                mrow = m_ref[kx:kx + 1, :]                         # (1, HW)
                part = jnp.zeros((Nb, HW), jnp.float32)
                for ky in range(K):
                    s = LPAD + (ky - P) * W + (kx - P)             # static offset
                    wa = w_ref[ky * K + kx]                        # avg tap
                    wm = w_ref[K * K + ky * K + kx]                # max tap
                    part = part + wa * pad_ref[0:Nb, s:s + HW] \
                                + wm * pad_ref[Nb:2 * Nb, s:s + HW]
                acc = acc + mrow * part
            # TODO(synk): for very large H*W, tile this tap loop over lane
            # chunks to bound vreg pressure; irrelevant at these map sizes.

            sig = jax.nn.sigmoid(acc).astype(o_ref.dtype)
            for b in range(Nb):
                o_ref[b] = sig[b:b + 1, :]

    out_flat = pl.pallas_call(
        kernel,
        out_shape=jax.ShapeDtypeStruct((N, 1, HW), x.dtype),
        grid=(N // Nb, NC),
        in_specs=[
            pl.BlockSpec(memory_space=pltpu.MemorySpace.SMEM),        # taps
            pl.BlockSpec((K, HW), lambda n, c: (0, 0)),               # masks
            pl.BlockSpec((Nb, Ct, HW), lambda n, c: (n, c, 0)),       # x chunk
        ],
        out_specs=pl.BlockSpec((Nb, 1, HW), lambda n, c: (n, 0, 0)),
        scratch_shapes=[
            pltpu.VMEM((2 * Nb, HW), jnp.float32),    # running sum / max
            pltpu.VMEM((2 * Nb, HWP), jnp.float32),   # zero-margined flat maps
        ],
        compiler_params=pltpu.CompilerParams(
            dimension_semantics=("parallel", "arbitrary")),
    )(w_flat, colmask, x_flat)

    return out_flat.reshape(N, 1, H, W)


def _reference(x, w):
    avg = jnp.mean(x, axis=1, keepdims=True)
    mx = jnp.max(x, axis=1, keepdims=True)
    xc = jnp.concatenate([avg, mx], axis=1)
    y = jax.lax.conv_general_dilated(
        xc, w, window_strides=(1, 1), padding=[(P, P), (P, P)],
        dimension_numbers=("NCHW", "OIHW", "NCHW"))
    return jax.nn.sigmoid(y)


if __name__ == "__main__":
    key = jax.random.PRNGKey(0)
    k1, k2, k3 = jax.random.split(key, 3)

    # Primary small test shape.
    N, C, H, W = 2, 4, 16, 16
    x = jax.random.normal(k1, (N, C, H, W), dtype=jnp.float32)

    # Deterministic conv weight init (PyTorch-style uniform(-1/sqrt(fan_in), ..)).
    fan_in = 2 * K * K
    bound = 1.0 / (fan_in ** 0.5)
    w = jax.random.uniform(k2, (1, 2, K, K), minval=-bound, maxval=bound,
                           dtype=jnp.float32)

    out = spatial_attention(x, w)
    jax.block_until_ready(out)
    ref = _reference(x, w)
    assert out.shape == (N, 1, H, W)
    assert jnp.allclose(out, ref, atol=1e-5, rtol=1e-5)

    # Exercise the channel-tiled accumulation (c-axis) and batch-tiling paths.
    x2 = jax.random.normal(k3, (4, 16, 8, 8), dtype=jnp.float32)
    out2 = spatial_attention(x2, w, nb=2, ct=8)
    jax.block_until_ready(out2)
    ref2 = _reference(x2, w)
    assert jnp.allclose(out2, ref2, atol=1e-5, rtol=1e-5)

    print("KERNEL_OK")
</pallas_src>

<mosaic_0001>
module attributes {stable_mosaic.version = 11 : i64} {
  func.func @kernel(%arg0: i32, %arg1: i32, %arg2: memref<98xf32, #tpu.memory_space<smem>>, %arg3: memref<7x256xf32, #tpu.memory_space<vmem>>, %arg4: memref<1x4x256xf32, #tpu.memory_space<vmem>>, %arg5: memref<1x1x256xf32, #tpu.memory_space<vmem>>, %arg6: memref<2x256xf32, #tpu.memory_space<vmem>>, %arg7: memref<2x512xf32, #tpu.memory_space<vmem>>) attributes {dimension_semantics = [#tpu.dimension_semantics<parallel>, #tpu.dimension_semantics<arbitrary>], iteration_bounds = array<i64: 2, 1>, scalar_prefetch = 0 : i64, scratch_operands = 2 : i64, tpu.core_type = #tpu.core_type<tc>, window_params = [{transform_indices = @transform_0, window_bounds = array<i64: 98>}, {pipeline_mode = #tpu.pipeline_mode<synchronous>, transform_indices = @transform_1, window_bounds = array<i64: 7, 256>}, {transform_indices = @transform_2, window_bounds = array<i64: 1, 4, 256>}, {transform_indices = @transform_3, window_bounds = array<i64: 1, 1, 256>}]} {
    %c0_i32 = arith.constant 0 : i32
    %0 = arith.cmpi eq, %arg1, %c0_i32 : i32
    %1 = arith.extui %0 : i1 to i32
    %c0_i32_0 = arith.constant 0 : i32
    %2 = arith.cmpi ne, %1, %c0_i32_0 : i32
    scf.if %2 {
      %c0 = arith.constant 0 : index
      %c0_5 = arith.constant 0 : index
      %c0_6 = arith.constant 0 : index
      %9 = vector.load %arg4[%c0, %c0_5, %c0_6] : memref<1x4x256xf32, #tpu.memory_space<vmem>>, vector<1x4x256xf32>
      %10 = vector.shape_cast %9 : vector<1x4x256xf32> to vector<4x256xf32>
      %cst = arith.constant dense<0.000000e+00> : vector<256xf32>
      %11 = vector.multi_reduction <add>, %10, %cst [0] : vector<4x256xf32> to vector<256xf32>
      %12 = vector.shape_cast %11 : vector<256xf32> to vector<1x256xf32>
      %c0_7 = arith.constant 0 : index
      %c0_8 = arith.constant 0 : index
      %13 = vector.load %arg6[%c0_7, %c0_8] : memref<2x256xf32, #tpu.memory_space<vmem>>, vector<1x256xf32>
      tpu.vector_store %arg6[%c0_7, %c0_8], %12 {strides = array<i32>} : memref<2x256xf32, #tpu.memory_space<vmem>>, vector<1x256xf32>,
      %cst_9 = arith.constant dense<0xFF800000> : vector<256xf32>
      %14 = vector.multi_reduction <maximumf>, %10, %cst_9 [0] : vector<4x256xf32> to vector<256xf32>
      %15 = vector.shape_cast %14 : vector<256xf32> to vector<1x256xf32>
      %c1 = arith.constant 1 : index
      %c0_10 = arith.constant 0 : index
      %16 = vector.load %arg6[%c1, %c0_10] : memref<2x256xf32, #tpu.memory_space<vmem>>, vector<1x256xf32>
      tpu.vector_store %arg6[%c1, %c0_10], %15 {strides = array<i32>} : memref<2x256xf32, #tpu.memory_space<vmem>>, vector<1x256xf32>,
    } else {
    }
    %c0_i32_1 = arith.constant 0 : i32
    %3 = arith.cmpi sgt, %arg1, %c0_i32_1 : i32
    %4 = arith.extui %3 : i1 to i32
    %c0_i32_2 = arith.constant 0 : i32
    %5 = arith.cmpi ne, %4, %c0_i32_2 : i32
    scf.if %5 {
      %c0 = arith.constant 0 : index
      %c0_5 = arith.constant 0 : index
      %c0_6 = arith.constant 0 : index
      %9 = vector.load %arg4[%c0, %c0_5, %c0_6] : memref<1x4x256xf32, #tpu.memory_space<vmem>>, vector<1x4x256xf32>
      %10 = vector.shape_cast %9 : vector<1x4x256xf32> to vector<4x256xf32>
      %c0_7 = arith.constant 0 : index
      %c0_8 = arith.constant 0 : index
      %11 = vector.load %arg6[%c0_7, %c0_8] : memref<2x256xf32, #tpu.memory_space<vmem>>, vector<1x256xf32>
      %cst = arith.constant dense<0.000000e+00> : vector<256xf32>
      %12 = vector.multi_reduction <add>, %10, %cst [0] : vector<4x256xf32> to vector<256xf32>
      %13 = vector.shape_cast %12 : vector<256xf32> to vector<1x256xf32>
      %14 = arith.addf %11, %13 : vector<1x256xf32>
      %c0_9 = arith.constant 0 : index
      %c0_10 = arith.constant 0 : index
      %15 = vector.load %arg6[%c0_9, %c0_10] : memref<2x256xf32, #tpu.memory_space<vmem>>, vector<1x256xf32>
      tpu.vector_store %arg6[%c0_9, %c0_10], %14 {strides = array<i32>} : memref<2x256xf32, #tpu.memory_space<vmem>>, vector<1x256xf32>,
      %c1 = arith.constant 1 : index
      %c0_11 = arith.constant 0 : index
      %16 = vector.load %arg6[%c1, %c0_11] : memref<2x256xf32, #tpu.memory_space<vmem>>, vector<1x256xf32>
      %cst_12 = arith.constant dense<0xFF800000> : vector<256xf32>
      %17 = vector.multi_reduction <maximumf>, %10, %cst_12 [0] : vector<4x256xf32> to vector<256xf32>
      %18 = vector.shape_cast %17 : vector<256xf32> to vector<1x256xf32>
      %19 = arith.maximumf %16, %18 : vector<1x256xf32>
      %c1_13 = arith.constant 1 : index
      %c0_14 = arith.constant 0 : index
      %20 = vector.load %arg6[%c1_13, %c0_14] : memref<2x256xf32, #tpu.memory_space<vmem>>, vector<1x256xf32>
      tpu.vector_store %arg6[%c1_13, %c0_14], %19 {strides = array<i32>} : memref<2x256xf32, #tpu.memory_space<vmem>>, vector<1x256xf32>,
    } else {
    }
    %c0_i32_3 = arith.constant 0 : i32
    %6 = arith.cmpi eq, %arg1, %c0_i32_3 : i32
    %7 = arith.extui %6 : i1 to i32
    %c0_i32_4 = arith.constant 0 : i32
    %8 = arith.cmpi ne, %7, %c0_i32_4 : i32
    scf.if %8 {
      %cst = arith.constant 0.000000e+00 : f32
      %9 = vector.broadcast %cst : f32 to vector<2x512xf32>
      %c0 = arith.constant 0 : index
      %c0_5 = arith.constant 0 : index
      %10 = vector.load %arg7[%c0, %c0_5] : memref<2x512xf32, #tpu.memory_space<vmem>>, vector<2x512xf32>
      tpu.vector_store %arg7[%c0, %c0_5], %9 {strides = array<i32>} : memref<2x512xf32, #tpu.memory_space<vmem>>, vector<2x512xf32>,
      %c0_6 = arith.constant 0 : index
      %c0_7 = arith.constant 0 : index
      %11 = vector.load %arg6[%c0_6, %c0_7] : memref<2x256xf32, #tpu.memory_space<vmem>>, vector<2x256xf32>
      %c0_8 = arith.constant 0 : index
      %c128 = arith.constant 128 : index
      %12 = vector.load %arg7[%c0_8, %c128] : memref<2x512xf32, #tpu.memory_space<vmem>>, vector<2x256xf32>
      tpu.vector_store %arg7[%c0_8, %c128], %11 {strides = array<i32>} : memref<2x512xf32, #tpu.memory_space<vmem>>, vector<2x256xf32>,
      %cst_9 = arith.constant 0.000000e+00 : f32
      %13 = vector.broadcast %cst_9 : f32 to vector<1x256xf32>
      %c0_10 = arith.constant 0 : index
      %c0_11 = arith.constant 0 : index
      %14 = vector.load %arg3[%c0_10, %c0_11] : memref<7x256xf32, #tpu.memory_space<vmem>>, vector<1x256xf32>
      %cst_12 = arith.constant 0.000000e+00 : f32
      %15 = vector.broadcast %cst_12 : f32 to vector<1x256xf32>
      %c0_13 = arith.constant 0 : index
      %16 = memref.load %arg2[%c0_13] : memref<98xf32, #tpu.memory_space<smem>>
      %c49 = arith.constant 49 : index
      %17 = memref.load %arg2[%c49] : memref<98xf32, #tpu.memory_space<smem>>
      %c0_14 = arith.constant 0 : index
      %c77 = arith.constant 77 : index
      %18 = vector.load %arg7[%c0_14, %c77] : memref<2x512xf32, #tpu.memory_space<vmem>>, vector<1x256xf32>
      %19 = vector.broadcast %16 : f32 to vector<1x256xf32>
      %20 = arith.mulf %19, %18 : vector<1x256xf32>
      %21 = arith.addf %15, %20 : vector<1x256xf32>
      %c1 = arith.constant 1 : index
      %c77_15 = arith.constant 77 : index
      %22 = vector.load %arg7[%c1, %c77_15] : memref<2x512xf32, #tpu.memory_space<vmem>>, vector<1x256xf32>
      %23 = vector.broadcast %17 : f32 to vector<1x256xf32>
      %24 = arith.mulf %23, %22 : vector<1x256xf32>
      %25 = arith.addf %21, %24 : vector<1x256xf32>
      %c7 = arith.constant 7 : index
      %26 = memref.load %arg2[%c7] : memref<98xf32, #tpu.memory_space<smem>>
      %c56 = arith.constant 56 : index
      %27 = memref.load %arg2[%c56] : memref<98xf32, #tpu.memory_space<smem>>
      %c0_16 = arith.constant 0 : index
      %c93 = arith.constant 93 : index
      %28 = vector.load %arg7[%c0_16, %c93] : memref<2x512xf32, #tpu.memory_space<vmem>>, vector<1x256xf32>
      %29 = vector.broadcast %26 : f32 to vector<1x256xf32>
      %30 = arith.mulf %29, %28 : vector<1x256xf32>
      %31 = arith.addf %25, %30 : vector<1x256xf32>
      %c1_17 = arith.constant 1 : index
      %c93_18 = arith.constant 93 : index
      %32 = vector.load %arg7[%c1_17, %c93_18] : memref<2x512xf32, #tpu.memory_space<vmem>>, vector<1x256xf32>
      %33 = vector.broadcast %27 : f32 to vector<1x256xf32>
      %34 = arith.mulf %33, %32 : vector<1x256xf32>
      %35 = arith.addf %31, %34 : vector<1x256xf32>
      %c14 = arith.constant 14 : index
      %36 = memref.load %arg2[%c14] : memref<98xf32, #tpu.memory_space<smem>>
      %c63 = arith.constant 63 : index
      %37 = memref.load %arg2[%c63] : memref<98xf32, #tpu.memory_space<smem>>
      %c0_19 = arith.constant 0 : index
      %c109 = arith.constant 109 : index
      %38 = vector.load %arg7[%c0_19, %c109] : memref<2x512xf32, #tpu.memory_space<vmem>>, vector<1x256xf32>
      %39 = vector.broadcast %36 : f32 to vector<1x256xf32>
      %40 = arith.mulf %39, %38 : vector<1x256xf32>
      %41 = arith.addf %35, %40 : vector<1x256xf32>
      %c1_20 = arith.constant 1 : index
      %c109_21 = arith.constant 109 : index
      %42 = vector.load %arg7[%c1_20, %c109_21] : memref<2x512xf32, #tpu.memory_space<vmem>>, vector<1x256xf32>
      %43 = vector.broadcast %37 : f32 to vector<1x256xf32>
      %44 = arith.mulf %43, %42 : vector<1x256xf32>
      %45 = arith.addf %41, %44 : vector<1x256xf32>
      %c21 = arith.constant 21 : index
      %46 = memref.load %arg2[%c21] : memref<98xf32, #tpu.memory_space<smem>>
      %c70 = arith.constant 70 : index
      %47 = memref.load %arg2[%c70] : memref<98xf32, #tpu.memory_space<smem>>
      %c0_22 = arith.constant 0 : index
      %c125 = arith.constant 125 : index
      %48 = vector.load %arg7[%c0_22, %c125] : memref<2x512xf32, #tpu.memory_space<vmem>>, vector<1x256xf32>
      %49 = vector.broadcast %46 : f32 to vector<1x256xf32>
      %50 = arith.mulf %49, %48 : vector<1x256xf32>
      %51 = arith.addf %45, %50 : vector<1x256xf32>
      %c1_23 = arith.constant 1 : index
      %c125_24 = arith.constant 125 : index
      %52 = vector.load %arg7[%c1_23, %c125_24] : memref<2x512xf32, #tpu.memory_space<vmem>>, vector<1x256xf32>
      %53 = vector.broadcast %47 : f32 to vector<1x256xf32>
      %54 = arith.mulf %53, %52 : vector<1x256xf32>
      %55 = arith.addf %51, %54 : vector<1x256xf32>
      %c28 = arith.constant 28 : index
      %56 = memref.load %arg2[%c28] : memref<98xf32, #tpu.memory_space<smem>>
      %c77_25 = arith.constant 77 : index
      %57 = memref.load %arg2[%c77_25] : memref<98xf32, #tpu.memory_space<smem>>
      %c0_26 = arith.constant 0 : index
      %c141 = arith.constant 141 : index
      %58 = vector.load %arg7[%c0_26, %c141] : memref<2x512xf32, #tpu.memory_space<vmem>>, vector<1x256xf32>
      %59 = vector.broadcast %56 : f32 to vector<1x256xf32>
      %60 = arith.mulf %59, %58 : vector<1x256xf32>
      %61 = arith.addf %55, %60 : vector<1x256xf32>
      %c1_27 = arith.constant 1 : index
      %c141_28 = arith.constant 141 : index
      %62 = vector.load %arg7[%c1_27, %c141_28] : memref<2x512xf32, #tpu.memory_space<vmem>>, vector<1x256xf32>
      %63 = vector.broadcast %57 : f32 to vector<1x256xf32>
      %64 = arith.mulf %63, %62 : vector<1x256xf32>
      %65 = arith.addf %61, %64 : vector<1x256xf32>
      %c35 = arith.constant 35 : index
      %66 = memref.load %arg2[%c35] : memref<98xf32, #tpu.memory_space<smem>>
      %c84 = arith.constant 84 : index
      %67 = memref.load %arg2[%c84] : memref<98xf32, #tpu.memory_space<smem>>
      %c0_29 = arith.constant 0 : index
      %c157 = arith.constant 157 : index
      %68 = vector.load %arg7[%c0_29, %c157] : memref<2x512xf32, #tpu.memory_space<vmem>>, vector<1x256xf32>
      %69 = vector.broadcast %66 : f32 to vector<1x256xf32>
      %70 = arith.mulf %69, %68 : vector<1x256xf32>
      %71 = arith.addf %65, %70 : vector<1x256xf32>
      %c1_30 = arith.constant 1 : index
      %c157_31 = arith.constant 157 : index
      %72 = vector.load %arg7[%c1_30, %c157_31] : memref<2x512xf32, #tpu.memory_space<vmem>>, vector<1x256xf32>
      %73 = vector.broadcast %67 : f32 to vector<1x256xf32>
      %74 = arith.mulf %73, %72 : vector<1x256xf32>
      %75 = arith.addf %71, %74 : vector<1x256xf32>
      %c42 = arith.constant 42 : index
      %76 = memref.load %arg2[%c42] : memref<98xf32, #tpu.memory_space<smem>>
      %c91 = arith.constant 91 : index
      %77 = memref.load %arg2[%c91] : memref<98xf32, #tpu.memory_space<smem>>
      %c0_32 = arith.constant 0 : index
      %c173 = arith.constant 173 : index
      %78 = vector.load %arg7[%c0_32, %c173] : memref<2x512xf32, #tpu.memory_space<vmem>>, vector<1x256xf32>
      %79 = vector.broadcast %76 : f32 to vector<1x256xf32>
      %80 = arith.mulf %79, %78 : vector<1x256xf32>
      %81 = arith.addf %75, %80 : vector<1x256xf32>
      %c1_33 = arith.constant 1 : index
      %c173_34 = arith.constant 173 : index
      %82 = vector.load %arg7[%c1_33, %c173_34] : memref<2x512xf32, #tpu.memory_space<vmem>>, vector<1x256xf32>
      %83 = vector.broadcast %77 : f32 to vector<1x256xf32>
      %84 = arith.mulf %83, %82 : vector<1x256xf32>
      %85 = arith.addf %81, %84 : vector<1x256xf32>
      %86 = arith.mulf %14, %85 : vector<1x256xf32>
      %87 = arith.addf %13, %86 : vector<1x256xf32>
      %c1_35 = arith.constant 1 : index
      %c0_36 = arith.constant 0 : index
      %88 = vector.load %arg3[%c1_35, %c0_36] : memref<7x256xf32, #tpu.memory_space<vmem>>, vector<1x256xf32>
      %cst_37 = arith.constant 0.000000e+00 : f32
      %89 = vector.broadcast %cst_37 : f32 to vector<1x256xf32>
      %c1_38 = arith.constant 1 : index
      %90 = memref.load %arg2[%c1_38] : memref<98xf32, #tpu.memory_space<smem>>
      %c50 = arith.constant 50 : index
      %91 = memref.load %arg2[%c50] : memref<98xf32, #tpu.memory_space<smem>>
      %c0_39 = arith.constant 0 : index
      %c78 = arith.constant 78 : index
      %92 = vector.load %arg7[%c0_39, %c78] : memref<2x512xf32, #tpu.memory_space<vmem>>, vector<1x256xf32>
      %93 = vector.broadcast %90 : f32 to vector<1x256xf32>
      %94 = arith.mulf %93, %92 : vector<1x256xf32>
      %95 = arith.addf %89, %94 : vector<1x256xf32>
      %c1_40 = arith.constant 1 : index
      %c78_41 = arith.constant 78 : index
      %96 = vector.load %arg7[%c1_40, %c78_41] : memref<2x512xf32, #tpu.memory_space<vmem>>, vector<1x256xf32>
      %97 = vector.broadcast %91 : f32 to vector<1x256xf32>
      %98 = arith.mulf %97, %96 : vector<1x256xf32>
      %99 = arith.addf %95, %98 : vector<1x256xf32>
      %c8 = arith.constant 8 : index
      %100 = memref.load %arg2[%c8] : memref<98xf32, #tpu.memory_space<smem>>
      %c57 = arith.constant 57 : index
      %101 = memref.load %arg2[%c57] : memref<98xf32, #tpu.memory_space<smem>>
      %c0_42 = arith.constant 0 : index
      %c94 = arith.constant 94 : index
      %102 = vector.load %arg7[%c0_42, %c94] : memref<2x512xf32, #tpu.memory_space<vmem>>, vector<1x256xf32>
      %103 = vector.broadcast %100 : f32 to vector<1x256xf32>
      %104 = arith.mulf %103, %102 : vector<1x256xf32>
      %105 = arith.addf %99, %104 : vector<1x256xf32>
      %c1_43 = arith.constant 1 : index
      %c94_44 = arith.constant 94 : index
      %106 = vector.load %arg7[%c1_43, %c94_44] : memref<2x512xf32, #tpu.memory_space<vmem>>, vector<1x256xf32>
      %107 = vector.broadcast %101 : f32 to vector<1x256xf32>
      %108 = arith.mulf %107, %106 : vector<1x256xf32>
      %109 = arith.addf %105, %108 : vector<1x256xf32>
      %c15 = arith.constant 15 : index
      %110 = memref.load %arg2[%c15] : memref<98xf32, #tpu.memory_space<smem>>
      %c64 = arith.constant 64 : index
      %111 = memref.load %arg2[%c64] : memref<98xf32, #tpu.memory_space<smem>>
      %c0_45 = arith.constant 0 : index
      %c110 = arith.constant 110 : index
      %112 = vector.load %arg7[%c0_45, %c110] : memref<2x512xf32, #tpu.memory_space<vmem>>, vector<1x256xf32>
      %113 = vector.broadcast %110 : f32 to vector<1x256xf32>
      %114 = arith.mulf %113, %112 : vector<1x256xf32>
      %115 = arith.addf %109, %114 : vector<1x256xf32>
      %c1_46 = arith.constant 1 : index
      %c110_47 = arith.constant 110 : index
      %116 = vector.load %arg7[%c1_46, %c110_47] : memref<2x512xf32, #tpu.memory_space<vmem>>, vector<1x256xf32>
      %117 = vector.broadcast %111 : f32 to vector<1x256xf32>
      %118 = arith.mulf %117, %116 : vector<1x256xf32>
      %119 = arith.addf %115, %118 : vector<1x256xf32>
      %c22 = arith.constant 22 : index
      %120 = memref.load %arg2[%c22] : memref<98xf32, #tpu.memory_space<smem>>
      %c71 = arith.constant 71 : index
      %121 = memref.load %arg2[%c71] : memref<98xf32, #tpu.memory_space<smem>>
      %c0_48 = arith.constant 0 : index
      %c126 = arith.constant 126 : index
      %122 = vector.load %arg7[%c0_48, %c126] : memref<2x512xf32, #tpu.memory_space<vmem>>, vector<1x256xf32>
      %123 = vector.broadcast %120 : f32 to vector<1x256xf32>
      %124 = arith.mulf %123, %122 : vector<1x256xf32>
      %125 = arith.addf %119, %124 : vector<1x256xf32>
      %c1_49 = arith.constant 1 : index
      %c126_50 = arith.constant 126 : index
      %126 = vector.load %arg7[%c1_49, %c126_50] : memref<2x512xf32, #tpu.memory_space<vmem>>, vector<1x256xf32>
      %127 = vector.broadcast %121 : f32 to vector<1x256xf32>
      %128 = arith.mulf %127, %126 : vector<1x256xf32>
      %129 = arith.addf %125, %128 : vector<1x256xf32>
      %c29 = arith.constant 29 : index
      %130 = memref.load %arg2[%c29] : memref<98xf32, #tpu.memory_space<smem>>
      %c78_51 = arith.constant 78 : index
      %131 = memref.load %arg2[%c78_51] : memref<98xf32, #tpu.memory_space<smem>>
      %c0_52 = arith.constant 0 : index
      %c142 = arith.constant 142 : index
      %132 = vector.load %arg7[%c0_52, %c142] : memref<2x512xf32, #tpu.memory_space<vmem>>, vector<1x256xf32>
      %133 = vector.broadcast %130 : f32 to vector<1x256xf32>
      %134 = arith.mulf %133, %132 : vector<1x256xf32>
      %135 = arith.addf %129, %134 : vector<1x256xf32>
      %c1_53 = arith.constant 1 : index
      %c142_54 = arith.constant 142 : index
      %136 = vector.load %arg7[%c1_53, %c142_54] : memref<2x512xf32, #tpu.memory_space<vmem>>, vector<1x256xf32>
      %137 = vector.broadcast %131 : f32 to vector<1x256xf32>
      %138 = arith.mulf %137, %136 : vector<1x256xf32>
      %139 = arith.addf %135, %138 : vector<1x256xf32>
      %c36 = arith.constant 36 : index
      %140 = memref.load %arg2[%c36] : memref<98xf32, #tpu.memory_space<smem>>
      %c85 = arith.constant 85 : index
      %141 = memref.load %arg2[%c85] : memref<98xf32, #tpu.memory_space<smem>>
      %c0_55 = arith.constant 0 : index
      %c158 = arith.constant 158 : index
      %142 = vector.load %arg7[%c0_55, %c158] : memref<2x512xf32, #tpu.memory_space<vmem>>, vector<1x256xf32>
      %143 = vector.broadcast %140 : f32 to vector<1x256xf32>
      %144 = arith.mulf %143, %142 : vector<1x256xf32>
      %145 = arith.addf %139, %144 : vector<1x256xf32>
      %c1_56 = arith.constant 1 : index
      %c158_57 = arith.constant 158 : index
      %146 = vector.load %arg7[%c1_56, %c158_57] : memref<2x512xf32, #tpu.memory_space<vmem>>, vector<1x256xf32>
      %147 = vector.broadcast %141 : f32 to vector<1x256xf32>
      %148 = arith.mulf %147, %146 : vector<1x256xf32>
      %149 = arith.addf %145, %148 : vector<1x256xf32>
      %c43 = arith.constant 43 : index
      %150 = memref.load %arg2[%c43] : memref<98xf32, #tpu.memory_space<smem>>
      %c92 = arith.constant 92 : index
      %151 = memref.load %arg2[%c92] : memref<98xf32, #tpu.memory_space<smem>>
      %c0_58 = arith.constant 0 : index
      %c174 = arith.constant 174 : index
      %152 = vector.load %arg7[%c0_58, %c174] : memref<2x512xf32, #tpu.memory_space<vmem>>, vector<1x256xf32>
      %153 = vector.broadcast %150 : f32 to vector<1x256xf32>
      %154 = arith.mulf %153, %152 : vector<1x256xf32>
      %155 = arith.addf %149, %154 : vector<1x256xf32>
      %c1_59 = arith.constant 1 : index
      %c174_60 = arith.constant 174 : index
      %156 = vector.load %arg7[%c1_59, %c174_60] : memref<2x512xf32, #tpu.memory_space<vmem>>, vector<1x256xf32>
      %157 = vector.broadcast %151 : f32 to vector<1x256xf32>
      %158 = arith.mulf %157, %156 : vector<1x256xf32>
      %159 = arith.addf %155, %158 : vector<1x256xf32>
      %160 = arith.mulf %88, %159 : vector<1x256xf32>
      %161 = arith.addf %87, %160 : vector<1x256xf32>
      %c2 = arith.constant 2 : index
      %c0_61 = arith.constant 0 : index
      %162 = vector.load %arg3[%c2, %c0_61] : memref<7x256xf32, #tpu.memory_space<vmem>>, vector<1x256xf32>
      %cst_62 = arith.constant 0.000000e+00 : f32
      %163 = vector.broadcast %cst_62 : f32 to vector<1x256xf32>
      %c2_63 = arith.constant 2 : index
      %164 = memref.load %arg2[%c2_63] : memref<98xf32, #tpu.memory_space<smem>>
      %c51 = arith.constant 51 : index
      %165 = memref.load %arg2[%c51] : memref<98xf32, #tpu.memory_space<smem>>
      %c0_64 = arith.constant 0 : index
      %c79 = arith.constant 79 : index
      %166 = vector.load %arg7[%c0_64, %c79] : memref<2x512xf32, #tpu.memory_space<vmem>>, vector<1x256xf32>
      %167 = vector.broadcast %164 : f32 to vector<1x256xf32>
      %168 = arith.mulf %167, %166 : vector<1x256xf32>
      %169 = arith.addf %163, %168 : vector<1x256xf32>
      %c1_65 = arith.constant 1 : index
      %c79_66 = arith.constant 79 : index
      %170 = vector.load %arg7[%c1_65, %c79_66] : memref<2x512xf32, #tpu.memory_space<vmem>>, vector<1x256xf32>
      %171 = vector.broadcast %165 : f32 to vector<1x256xf32>
      %172 = arith.mulf %171, %170 : vector<1x256xf32>
      %173 = arith.addf %169, %172 : vector<1x256xf32>
      %c9 = arith.constant 9 : index
      %174 = memref.load %arg2[%c9] : memref<98xf32, #tpu.memory_space<smem>>
      %c58 = arith.constant 58 : index
      %175 = memref.load %arg2[%c58] : memref<98xf32, #tpu.memory_space<smem>>
      %c0_67 = arith.constant 0 : index
      %c95 = arith.constant 95 : index
      %176 = vector.load %arg7[%c0_67, %c95] : memref<2x512xf32, #tpu.memory_space<vmem>>, vector<1x256xf32>
      %177 = vector.broadcast %174 : f32 to vector<1x256xf32>
      %178 = arith.mulf %177, %176 : vector<1x256xf32>
      %179 = arith.addf %173, %178 : vector<1x256xf32>
      %c1_68 = arith.constant 1 : index
      %c95_69 = arith.constant 95 : index
      %180 = vector.load %arg7[%c1_68, %c95_69] : memref<2x512xf32, #tpu.memory_space<vmem>>, vector<1x256xf32>
      %181 = vector.broadcast %175 : f32 to vector<1x256xf32>
      %182 = arith.mulf %181, %180 : vector<1x256xf32>
      %183 = arith.addf %179, %182 : vector<1x256xf32>
      %c16 = arith.constant 16 : index
      %184 = memref.load %arg2[%c16] : memref<98xf32, #tpu.memory_space<smem>>
      %c65 = arith.constant 65 : index
      %185 = memref.load %arg2[%c65] : memref<98xf32, #tpu.memory_space<smem>>
      %c0_70 = arith.constant 0 : index
      %c111 = arith.constant 111 : index
      %186 = vector.load %arg7[%c0_70, %c111] : memref<2x512xf32, #tpu.memory_space<vmem>>, vector<1x256xf32>
      %187 = vector.broadcast %184 : f32 to vector<1x256xf32>
      %188 = arith.mulf %187, %186 : vector<1x256xf32>
      %189 = arith.addf %183, %188 : vector<1x256xf32>
      %c1_71 = arith.constant 1 : index
      %c111_72 = arith.constant 111 : index
      %190 = vector.load %arg7[%c1_71, %c111_72] : memref<2x512xf32, #tpu.memory_space<vmem>>, vector<1x256xf32>
      %191 = vector.broadcast %185 : f32 to vector<1x256xf32>
      %192 = arith.mulf %191, %190 : vector<1x256xf32>
      %193 = arith.addf %189, %192 : vector<1x256xf32>
      %c23 = arith.constant 23 : index
      %194 = memref.load %arg2[%c23] : memref<98xf32, #tpu.memory_space<smem>>
      %c72 = arith.constant 72 : index
      %195 = memref.load %arg2[%c72] : memref<98xf32, #tpu.memory_space<smem>>
      %c0_73 = arith.constant 0 : index
      %c127 = arith.constant 127 : index
      %196 = vector.load %arg7[%c0_73, %c127] : memref<2x512xf32, #tpu.memory_space<vmem>>, vector<1x256xf32>
      %197 = vector.broadcast %194 : f32 to vector<1x256xf32>
      %198 = arith.mulf %197, %196 : vector<1x256xf32>
      %199 = arith.addf %193, %198 : vector<1x256xf32>
      %c1_74 = arith.constant 1 : index
      %c127_75 = arith.constant 127 : index
      %200 = vector.load %arg7[%c1_74, %c127_75] : memref<2x512xf32, #tpu.memory_space<vmem>>, vector<1x256xf32>
      %201 = vector.broadcast %195 : f32 to vector<1x256xf32>
      %202 = arith.mulf %201, %200 : vector<1x256xf32>
      %203 = arith.addf %199, %202 : vector<1x256xf32>
      %c30 = arith.constant 30 : index
      %204 = memref.load %arg2[%c30] : memref<98xf32, #tpu.memory_space<smem>>
      %c79_76 = arith.constant 79 : index
      %205 = memref.load %arg2[%c79_76] : memref<98xf32, #tpu.memory_space<smem>>
      %c0_77 = arith.constant 0 : index
      %c143 = arith.constant 143 : index
      %206 = vector.load %arg7[%c0_77, %c143] : memref<2x512xf32, #tpu.memory_space<vmem>>, vector<1x256xf32>
      %207 = vector.broadcast %204 : f32 to vector<1x256xf32>
      %208 = arith.mulf %207, %206 : vector<1x256xf32>
      %209 = arith.addf %203, %208 : vector<1x256xf32>
      %c1_78 = arith.constant 1 : index
      %c143_79 = arith.constant 143 : index
      %210 = vector.load %arg7[%c1_78, %c143_79] : memref<2x512xf32, #tpu.memory_space<vmem>>, vector<1x256xf32>
      %211 = vector.broadcast %205 : f32 to vector<1x256xf32>
      %212 = arith.mulf %211, %210 : vector<1x256xf32>
      %213 = arith.addf %209, %212 : vector<1x256xf32>
      %c37 = arith.constant 37 : index
      %214 = memref.load %arg2[%c37] : memref<98xf32, #tpu.memory_space<smem>>
      %c86 = arith.constant 86 : index
      %215 = memref.load %arg2[%c86] : memref<98xf32, #tpu.memory_space<smem>>
      %c0_80 = arith.constant 0 : index
      %c159 = arith.constant 159 : index
      %216 = vector.load %arg7[%c0_80, %c159] : memref<2x512xf32, #tpu.memory_space<vmem>>, vector<1x256xf32>
      %217 = vector.broadcast %214 : f32 to vector<1x256xf32>
      %218 = arith.mulf %217, %216 : vector<1x256xf32>
      %219 = arith.addf %213, %218 : vector<1x256xf32>
      %c1_81 = arith.constant 1 : index
      %c159_82 = arith.constant 159 : index
      %220 = vector.load %arg7[%c1_81, %c159_82] : memref<2x512xf32, #tpu.memory_space<vmem>>, vector<1x256xf32>
      %221 = vector.broadcast %215 : f32 to vector<1x256xf32>
      %222 = arith.mulf %221, %220 : vector<1x256xf32>
      %223 = arith.addf %219, %222 : vector<1x256xf32>
      %c44 = arith.constant 44 : index
      %224 = memref.load %arg2[%c44] : memref<98xf32, #tpu.memory_space<smem>>
      %c93_83 = arith.constant 93 : index
      %225 = memref.load %arg2[%c93_83] : memref<98xf32, #tpu.memory_space<smem>>
      %c0_84 = arith.constant 0 : index
      %c175 = arith.constant 175 : index
      %226 = vector.load %arg7[%c0_84, %c175] : memref<2x512xf32, #tpu.memory_space<vmem>>, vector<1x256xf32>
      %227 = vector.broadcast %224 : f32 to vector<1x256xf32>
      %228 = arith.mulf %227, %226 : vector<1x256xf32>
      %229 = arith.addf %223, %228 : vector<1x256xf32>
      %c1_85 = arith.constant 1 : index
      %c175_86 = arith.constant 175 : index
      %230 = vector.load %arg7[%c1_85, %c175_86] : memref<2x512xf32, #tpu.memory_space<vmem>>, vector<1x256xf32>
      %231 = vector.broadcast %225 : f32 to vector<1x256xf32>
      %232 = arith.mulf %231, %230 : vector<1x256xf32>
      %233 = arith.addf %229, %232 : vector<1x256xf32>
      %234 = arith.mulf %162, %233 : vector<1x256xf32>
      %235 = arith.addf %161, %234 : vector<1x256xf32>
      %c3 = arith.constant 3 : index
      %c0_87 = arith.constant 0 : index
      %236 = vector.load %arg3[%c3, %c0_87] : memref<7x256xf32, #tpu.memory_space<vmem>>, vector<1x256xf32>
      %cst_88 = arith.constant 0.000000e+00 : f32
      %237 = vector.broadcast %cst_88 : f32 to vector<1x256xf32>
      %c3_89 = arith.constant 3 : index
      %238 = memref.load %arg2[%c3_89] : memref<98xf32, #tpu.memory_space<smem>>
      %c52 = arith.constant 52 : index
      %239 = memref.load %arg2[%c52] : memref<98xf32, #tpu.memory_space<smem>>
      %c0_90 = arith.constant 0 : index
      %c80 = arith.constant 80 : index
      %240 = vector.load %arg7[%c0_90, %c80] : memref<2x512xf32, #tpu.memory_space<vmem>>, vector<1x256xf32>
      %241 = vector.broadcast %238 : f32 to vector<1x256xf32>
      %242 = arith.mulf %241, %240 : vector<1x256xf32>
      %243 = arith.addf %237, %242 : vector<1x256xf32>
      %c1_91 = arith.constant 1 : index
      %c80_92 = arith.constant 80 : index
      %244 = vector.load %arg7[%c1_91, %c80_92] : memref<2x512xf32, #tpu.memory_space<vmem>>, vector<1x256xf32>
      %245 = vector.broadcast %239 : f32 to vector<1x256xf32>
      %246 = arith.mulf %245, %244 : vector<1x256xf32>
      %247 = arith.addf %243, %246 : vector<1x256xf32>
      %c10 = arith.constant 10 : index
      %248 = memref.load %arg2[%c10] : memref<98xf32, #tpu.memory_space<smem>>
      %c59 = arith.constant 59 : index
      %249 = memref.load %arg2[%c59] : memref<98xf32, #tpu.memory_space<smem>>
      %c0_93 = arith.constant 0 : index
      %c96 = arith.constant 96 : index
      %250 = vector.load %arg7[%c0_93, %c96] : memref<2x512xf32, #tpu.memory_space<vmem>>, vector<1x256xf32>
      %251 = vector.broadcast %248 : f32 to vector<1x256xf32>
      %252 = arith.mulf %251, %250 : vector<1x256xf32>
      %253 = arith.addf %247, %252 : vector<1x256xf32>
      %c1_94 = arith.constant 1 : index
      %c96_95 = arith.constant 96 : index
      %254 = vector.load %arg7[%c1_94, %c96_95] : memref<2x512xf32, #tpu.memory_space<vmem>>, vector<1x256xf32>
      %255 = vector.broadcast %249 : f32 to vector<1x256xf32>
      %256 = arith.mulf %255, %254 : vector<1x256xf32>
      %257 = arith.addf %253, %256 : vector<1x256xf32>
      %c17 = arith.constant 17 : index
      %258 = memref.load %arg2[%c17] : memref<98xf32, #tpu.memory_space<smem>>
      %c66 = arith.constant 66 : index
      %259 = memref.load %arg2[%c66] : memref<98xf32, #tpu.memory_space<smem>>
      %c0_96 = arith.constant 0 : index
      %c112 = arith.constant 112 : index
      %260 = vector.load %arg7[%c0_96, %c112] : memref<2x512xf32, #tpu.memory_space<vmem>>, vector<1x256xf32>
      %261 = vector.broadcast %258 : f32 to vector<1x256xf32>
      %262 = arith.mulf %261, %260 : vector<1x256xf32>
      %263 = arith.addf %257, %262 : vector<1x256xf32>
      %c1_97 = arith.constant 1 : index
      %c112_98 = arith.constant 112 : index
      %264 = vector.load %arg7[%c1_97, %c112_98] : memref<2x512xf32, #tpu.memory_space<vmem>>, vector<1x256xf32>
      %265 = vector.broadcast %259 : f32 to vector<1x256xf32>
      %266 = arith.mulf %265, %264 : vector<1x256xf32>
      %267 = arith.addf %263, %266 : vector<1x256xf32>
      %c24 = arith.constant 24 : index
      %268 = memref.load %arg2[%c24] : memref<98xf32, #tpu.memory_space<smem>>
      %c73 = arith.constant 73 : index
      %269 = memref.load %arg2[%c73] : memref<98xf32, #tpu.memory_space<smem>>
      %c0_99 = arith.constant 0 : index
      %c128_100 = arith.constant 128 : index
      %270 = vector.load %arg7[%c0_99, %c128_100] : memref<2x512xf32, #tpu.memory_space<vmem>>, vector<1x256xf32>
      %271 = vector.broadcast %268 : f32 to vector<1x256xf32>
      %272 = arith.mulf %271, %270 : vector<1x256xf32>
      %273 = arith.addf %267, %272 : vector<1x256xf32>
      %c1_101 = arith.constant 1 : index
      %c128_102 = arith.constant 128 : index
      %274 = vector.load %arg7[%c1_101, %c128_102] : memref<2x512xf32, #tpu.memory_space<vmem>>, vector<1x256xf32>
      %275 = vector.broadcast %269 : f32 to vector<1x256xf32>
      %276 = arith.mulf %275, %274 : vector<1x256xf32>
      %277 = arith.addf %273, %276 : vector<1x256xf32>
      %c31 = arith.constant 31 : index
      %278 = memref.load %arg2[%c31] : memref<98xf32, #tpu.memory_space<smem>>
      %c80_103 = arith.constant 80 : index
      %279 = memref.load %arg2[%c80_103] : memref<98xf32, #tpu.memory_space<smem>>
      %c0_104 = arith.constant 0 : index
      %c144 = arith.constant 144 : index
      %280 = vector.load %arg7[%c0_104, %c144] : memref<2x512xf32, #tpu.memory_space<vmem>>, vector<1x256xf32>
      %281 = vector.broadcast %278 : f32 to vector<1x256xf32>
      %282 = arith.mulf %281, %280 : vector<1x256xf32>
      %283 = arith.addf %277, %282 : vector<1x256xf32>
      %c1_105 = arith.constant 1 : index
      %c144_106 = arith.constant 144 : index
      %284 = vector.load %arg7[%c1_105, %c144_106] : memref<2x512xf32, #tpu.memory_space<vmem>>, vector<1x256xf32>
      %285 = vector.broadcast %279 : f32 to vector<1x256xf32>
      %286 = arith.mulf %285, %284 : vector<1x256xf32>
      %287 = arith.addf %283, %286 : vector<1x256xf32>
      %c38 = arith.constant 38 : index
      %288 = memref.load %arg2[%c38] : memref<98xf32, #tpu.memory_space<smem>>
      %c87 = arith.constant 87 : index
      %289 = memref.load %arg2[%c87] : memref<98xf32, #tpu.memory_space<smem>>
      %c0_107 = arith.constant 0 : index
      %c160 = arith.constant 160 : index
      %290 = vector.load %arg7[%c0_107, %c160] : memref<2x512xf32, #tpu.memory_space<vmem>>, vector<1x256xf32>
      %291 = vector.broadcast %288 : f32 to vector<1x256xf32>
      %292 = arith.mulf %291, %290 : vector<1x256xf32>
      %293 = arith.addf %287, %292 : vector<1x256xf32>
      %c1_108 = arith.constant 1 : index
      %c160_109 = arith.constant 160 : index
      %294 = vector.load %arg7[%c1_108, %c160_109] : memref<2x512xf32, #tpu.memory_space<vmem>>, vector<1x256xf32>
      %295 = vector.broadcast %289 : f32 to vector<1x256xf32>
      %296 = arith.mulf %295, %294 : vector<1x256xf32>
      %297 = arith.addf %293, %296 : vector<1x256xf32>
      %c45 = arith.constant 45 : index
      %298 = memref.load %arg2[%c45] : memref<98xf32, #tpu.memory_space<smem>>
      %c94_110 = arith.constant 94 : index
      %299 = memref.load %arg2[%c94_110] : memref<98xf32, #tpu.memory_space<smem>>
      %c0_111 = arith.constant 0 : index
      %c176 = arith.constant 176 : index
      %300 = vector.load %arg7[%c0_111, %c176] : memref<2x512xf32, #tpu.memory_space<vmem>>, vector<1x256xf32>
      %301 = vector.broadcast %298 : f32 to vector<1x256xf32>
      %302 = arith.mulf %301, %300 : vector<1x256xf32>
      %303 = arith.addf %297, %302 : vector<1x256xf32>
      %c1_112 = arith.constant 1 : index
      %c176_113 = arith.constant 176 : index
      %304 = vector.load %arg7[%c1_112, %c176_113] : memref<2x512xf32, #tpu.memory_space<vmem>>, vector<1x256xf32>
      %305 = vector.broadcast %299 : f32 to vector<1x256xf32>
      %306 = arith.mulf %305, %304 : vector<1x256xf32>
      %307 = arith.addf %303, %306 : vector<1x256xf32>
      %308 = arith.mulf %236, %307 : vector<1x256xf32>
      %309 = arith.addf %235, %308 : vector<1x256xf32>
      %c4 = arith.constant 4 : index
      %c0_114 = arith.constant 0 : index
      %310 = vector.load %arg3[%c4, %c0_114] : memref<7x256xf32, #tpu.memory_space<vmem>>, vector<1x256xf32>
      %cst_115 = arith.constant 0.000000e+00 : f32
      %311 = vector.broadcast %cst_115 : f32 to vector<1x256xf32>
      %c4_116 = arith.constant 4 : index
      %312 = memref.load %arg2[%c4_116] : memref<98xf32, #tpu.memory_space<smem>>
      %c53 = arith.constant 53 : index
      %313 = memref.load %arg2[%c53] : memref<98xf32, #tpu.memory_space<smem>>
      %c0_117 = arith.constant 0 : index
      %c81 = arith.constant 81 : index
      %314 = vector.load %arg7[%c0_117, %c81] : memref<2x512xf32, #tpu.memory_space<vmem>>, vector<1x256xf32>
      %315 = vector.broadcast %312 : f32 to vector<1x256xf32>
      %316 = arith.mulf %315, %314 : vector<1x256xf32>
      %317 = arith.addf %311, %316 : vector<1x256xf32>
      %c1_118 = arith.constant 1 : index
      %c81_119 = arith.constant 81 : index
      %318 = vector.load %arg7[%c1_118, %c81_119] : memref<2x512xf32, #tpu.memory_space<vmem>>, vector<1x256xf32>
      %319 = vector.broadcast %313 : f32 to vector<1x256xf32>
      %320 = arith.mulf %319, %318 : vector<1x256xf32>
      %321 = arith.addf %317, %320 : vector<1x256xf32>
      %c11 = arith.constant 11 : index
      %322 = memref.load %arg2[%c11] : memref<98xf32, #tpu.memory_space<smem>>
      %c60 = arith.constant 60 : index
      %323 = memref.load %arg2[%c60] : memref<98xf32, #tpu.memory_space<smem>>
      %c0_120 = arith.constant 0 : index
      %c97 = arith.constant 97 : index
      %324 = vector.load %arg7[%c0_120, %c97] : memref<2x512xf32, #tpu.memory_space<vmem>>, vector<1x256xf32>
      %325 = vector.broadcast %322 : f32 to vector<1x256xf32>
      %326 = arith.mulf %325, %324 : vector<1x256xf32>
      %327 = arith.addf %321, %326 : vector<1x256xf32>
      %c1_121 = arith.constant 1 : index
      %c97_122 = arith.constant 97 : index
      %328 = vector.load %arg7[%c1_121, %c97_122] : memref<2x512xf32, #tpu.memory_space<vmem>>, vector<1x256xf32>
      %329 = vector.broadcast %323 : f32 to vector<1x256xf32>
      %330 = arith.mulf %329, %328 : vector<1x256xf32>
      %331 = arith.addf %327, %330 : vector<1x256xf32>
      %c18 = arith.constant 18 : index
      %332 = memref.load %arg2[%c18] : memref<98xf32, #tpu.memory_space<smem>>
      %c67 = arith.constant 67 : index
      %333 = memref.load %arg2[%c67] : memref<98xf32, #tpu.memory_space<smem>>
      %c0_123 = arith.constant 0 : index
      %c113 = arith.constant 113 : index
      %334 = vector.load %arg7[%c0_123, %c113] : memref<2x512xf32, #tpu.memory_space<vmem>>, vector<1x256xf32>
      %335 = vector.broadcast %332 : f32 to vector<1x256xf32>
      %336 = arith.mulf %335, %334 : vector<1x256xf32>
      %337 = arith.addf %331, %336 : vector<1x256xf32>
      %c1_124 = arith.constant 1 : index
      %c113_125 = arith.constant 113 : index
      %338 = vector.load %arg7[%c1_124, %c113_125] : memref<2x512xf32, #tpu.memory_space<vmem>>, vector<1x256xf32>
      %339 = vector.broadcast %333 : f32 to vector<1x256xf32>
      %340 = arith.mulf %339, %338 : vector<1x256xf32>
      %341 = arith.addf %337, %340 : vector<1x256xf32>
      %c25 = arith.constant 25 : index
      %342 = memref.load %arg2[%c25] : memref<98xf32, #tpu.memory_space<smem>>
      %c74 = arith.constant 74 : index
      %343 = memref.load %arg2[%c74] : memref<98xf32, #tpu.memory_space<smem>>
      %c0_126 = arith.constant 0 : index
      %c129 = arith.constant 129 : index
      %344 = vector.load %arg7[%c0_126, %c129] : memref<2x512xf32, #tpu.memory_space<vmem>>, vector<1x256xf32>
      %345 = vector.broadcast %342 : f32 to vector<1x256xf32>
      %346 = arith.mulf %345, %344 : vector<1x256xf32>
      %347 = arith.addf %341, %346 : vector<1x256xf32>
      %c1_127 = arith.constant 1 : index
      %c129_128 = arith.constant 129 : index
      %348 = vector.load %arg7[%c1_127, %c129_128] : memref<2x512xf32, #tpu.memory_space<vmem>>, vector<1x256xf32>
      %349 = vector.broadcast %343 : f32 to vector<1x256xf32>
      %350 = arith.mulf %349, %348 : vector<1x256xf32>
      %351 = arith.addf %347, %350 : vector<1x256xf32>
      %c32 = arith.constant 32 : index
      %352 = memref.load %arg2[%c32] : memref<98xf32, #tpu.memory_space<smem>>
      %c81_129 = arith.constant 81 : index
      %353 = memref.load %arg2[%c81_129] : memref<98xf32, #tpu.memory_space<smem>>
      %c0_130 = arith.constant 0 : index
      %c145 = arith.constant 145 : index
      %354 = vector.load %arg7[%c0_130, %c145] : memref<2x512xf32, #tpu.memory_space<vmem>>, vector<1x256xf32>
      %355 = vector.broadcast %352 : f32 to vector<1x256xf32>
      %356 = arith.mulf %355, %354 : vector<1x256xf32>
      %357 = arith.addf %351, %356 : vector<1x256xf32>
      %c1_131 = arith.constant 1 : index
      %c145_132 = arith.constant 145 : index
      %358 = vector.load %arg7[%c1_131, %c145_132] : memref<2x512xf32, #tpu.memory_space<vmem>>, vector<1x256xf32>
      %359 = vector.broadcast %353 : f32 to vector<1x256xf32>
      %360 = arith.mulf %359, %358 : vector<1x256xf32>
      %361 = arith.addf %357, %360 : vector<1x256xf32>
      %c39 = arith.constant 39 : index
      %362 = memref.load %arg2[%c39] : memref<98xf32, #tpu.memory_space<smem>>
      %c88 = arith.constant 88 : index
      %363 = memref.load %arg2[%c88] : memref<98xf32, #tpu.memory_space<smem>>
      %c0_133 = arith.constant 0 : index
      %c161 = arith.constant 161 : index
      %364 = vector.load %arg7[%c0_133, %c161] : memref<2x512xf32, #tpu.memory_space<vmem>>, vector<1x256xf32>
      %365 = vector.broadcast %362 : f32 to vector<1x256xf32>
      %366 = arith.mulf %365, %364 : vector<1x256xf32>
      %367 = arith.addf %361, %366 : vector<1x256xf32>
      %c1_134 = arith.constant 1 : index
      %c161_135 = arith.constant 161 : index
      %368 = vector.load %arg7[%c1_134, %c161_135] : memref<2x512xf32, #tpu.memory_space<vmem>>, vector<1x256xf32>
      %369 = vector.broadcast %363 : f32 to vector<1x256xf32>
      %370 = arith.mulf %369, %368 : vector<1x256xf32>
      %371 = arith.addf %367, %370 : vector<1x256xf32>
      %c46 = arith.constant 46 : index
      %372 = memref.load %arg2[%c46] : memref<98xf32, #tpu.memory_space<smem>>
      %c95_136 = arith.constant 95 : index
      %373 = memref.load %arg2[%c95_136] : memref<98xf32, #tpu.memory_space<smem>>
      %c0_137 = arith.constant 0 : index
      %c177 = arith.constant 177 : index
      %374 = vector.load %arg7[%c0_137, %c177] : memref<2x512xf32, #tpu.memory_space<vmem>>, vector<1x256xf32>
      %375 = vector.broadcast %372 : f32 to vector<1x256xf32>
      %376 = arith.mulf %375, %374 : vector<1x256xf32>
      %377 = arith.addf %371, %376 : vector<1x256xf32>
      %c1_138 = arith.constant 1 : index
      %c177_139 = arith.constant 177 : index
      %378 = vector.load %arg7[%c1_138, %c177_139] : memref<2x512xf32, #tpu.memory_space<vmem>>, vector<1x256xf32>
      %379 = vector.broadcast %373 : f32 to vector<1x256xf32>
      %380 = arith.mulf %379, %378 : vector<1x256xf32>
      %381 = arith.addf %377, %380 : vector<1x256xf32>
      %382 = arith.mulf %310, %381 : vector<1x256xf32>
      %383 = arith.addf %309, %382 : vector<1x256xf32>
      %c5 = arith.constant 5 : index
      %c0_140 = arith.constant 0 : index
      %384 = vector.load %arg3[%c5, %c0_140] : memref<7x256xf32, #tpu.memory_space<vmem>>, vector<1x256xf32>
      %cst_141 = arith.constant 0.000000e+00 : f32
      %385 = vector.broadcast %cst_141 : f32 to vector<1x256xf32>
      %c5_142 = arith.constant 5 : index
      %386 = memref.load %arg2[%c5_142] : memref<98xf32, #tpu.memory_space<smem>>
      %c54 = arith.constant 54 : index
      %387 = memref.load %arg2[%c54] : memref<98xf32, #tpu.memory_space<smem>>
      %c0_143 = arith.constant 0 : index
      %c82 = arith.constant 82 : index
      %388 = vector.load %arg7[%c0_143, %c82] : memref<2x512xf32, #tpu.memory_space<vmem>>, vector<1x256xf32>
      %389 = vector.broadcast %386 : f32 to vector<1x256xf32>
      %390 = arith.mulf %389, %388 : vector<1x256xf32>
      %391 = arith.addf %385, %390 : vector<1x256xf32>
      %c1_144 = arith.constant 1 : index
      %c82_145 = arith.constant 82 : index
      %392 = vector.load %arg7[%c1_144, %c82_145] : memref<2x512xf32, #tpu.memory_space<vmem>>, vector<1x256xf32>
      %393 = vector.broadcast %387 : f32 to vector<1x256xf32>
      %394 = arith.mulf %393, %392 : vector<1x256xf32>
      %395 = arith.addf %391, %394 : vector<1x256xf32>
      %c12 = arith.constant 12 : index
      %396 = memref.load %arg2[%c12] : memref<98xf32, #tpu.memory_space<smem>>
      %c61 = arith.constant 61 : index
      %397 = memref.load %arg2[%c61] : memref<98xf32, #tpu.memory_space<smem>>
      %c0_146 = arith.constant 0 : index
      %c98 = arith.constant 98 : index
      %398 = vector.load %arg7[%c0_146, %c98] : memref<2x512xf32, #tpu.memory_space<vmem>>, vector<1x256xf32>
      %399 = vector.broadcast %396 : f32 to vector<1x256xf32>
      %400 = arith.mulf %399, %398 : vector<1x256xf32>
      %401 = arith.addf %395, %400 : vector<1x256xf32>
      %c1_147 = arith.constant 1 : index
      %c98_148 = arith.constant 98 : index
      %402 = vector.load %arg7[%c1_147, %c98_148] : memref<2x512xf32, #tpu.memory_space<vmem>>, vector<1x256xf32>
      %403 = vector.broadcast %397 : f32 to vector<1x256xf32>
      %404 = arith.mulf %403, %402 : vector<1x256xf32>
      %405 = arith.addf %401, %404 : vector<1x256xf32>
      %c19 = arith.constant 19 : index
      %406 = memref.load %arg2[%c19] : memref<98xf32, #tpu.memory_space<smem>>
      %c68 = arith.constant 68 : index
      %407 = memref.load %arg2[%c68] : memref<98xf32, #tpu.memory_space<smem>>
      %c0_149 = arith.constant 0 : index
      %c114 = arith.constant 114 : index
      %408 = vector.load %arg7[%c0_149, %c114] : memref<2x512xf32, #tpu.memory_space<vmem>>, vector<1x256xf32>
      %409 = vector.broadcast %406 : f32 to vector<1x256xf32>
      %410 = arith.mulf %409, %408 : vector<1x256xf32>
      %411 = arith.addf %405, %410 : vector<1x256xf32>
      %c1_150 = arith.constant 1 : index
      %c114_151 = arith.constant 114 : index
      %412 = vector.load %arg7[%c1_150, %c114_151] : memref<2x512xf32, #tpu.memory_space<vmem>>, vector<1x256xf32>
      %413 = vector.broadcast %407 : f32 to vector<1x256xf32>
      %414 = arith.mulf %413, %412 : vector<1x256xf32>
      %415 = arith.addf %411, %414 : vector<1x256xf32>
      %c26 = arith.constant 26 : index
      %416 = memref.load %arg2[%c26] : memref<98xf32, #tpu.memory_space<smem>>
      %c75 = arith.constant 75 : index
      %417 = memref.load %arg2[%c75] : memref<98xf32, #tpu.memory_space<smem>>
      %c0_152 = arith.constant 0 : index
      %c130 = arith.constant 130 : index
      %418 = vector.load %arg7[%c0_152, %c130] : memref<2x512xf32, #tpu.memory_space<vmem>>, vector<1x256xf32>
      %419 = vector.broadcast %416 : f32 to vector<1x256xf32>
      %420 = arith.mulf %419, %418 : vector<1x256xf32>
      %421 = arith.addf %415, %420 : vector<1x256xf32>
      %c1_153 = arith.constant 1 : index
      %c130_154 = arith.constant 130 : index
      %422 = vector.load %arg7[%c1_153, %c130_154] : memref<2x512xf32, #tpu.memory_space<vmem>>, vector<1x256xf32>
      %423 = vector.broadcast %417 : f32 to vector<1x256xf32>
      %424 = arith.mulf %423, %422 : vector<1x256xf32>
      %425 = arith.addf %421, %424 : vector<1x256xf32>
      %c33 = arith.constant 33 : index
      %426 = memref.load %arg2[%c33] : memref<98xf32, #tpu.memory_space<smem>>
      %c82_155 = arith.constant 82 : index
      %427 = memref.load %arg2[%c82_155] : memref<98xf32, #tpu.memory_space<smem>>
      %c0_156 = arith.constant 0 : index
      %c146 = arith.constant 146 : index
      %428 = vector.load %arg7[%c0_156, %c146] : memref<2x512xf32, #tpu.memory_space<vmem>>, vector<1x256xf32>
      %429 = vector.broadcast %426 : f32 to vector<1x256xf32>
      %430 = arith.mulf %429, %428 : vector<1x256xf32>
      %431 = arith.addf %425, %430 : vector<1x256xf32>
      %c1_157 = arith.constant 1 : index
      %c146_158 = arith.constant 146 : index
      %432 = vector.load %arg7[%c1_157, %c146_158] : memref<2x512xf32, #tpu.memory_space<vmem>>, vector<1x256xf32>
      %433 = vector.broadcast %427 : f32 to vector<1x256xf32>
      %434 = arith.mulf %433, %432 : vector<1x256xf32>
      %435 = arith.addf %431, %434 : vector<1x256xf32>
      %c40 = arith.constant 40 : index
      %436 = memref.load %arg2[%c40] : memref<98xf32, #tpu.memory_space<smem>>
      %c89 = arith.constant 89 : index
      %437 = memref.load %arg2[%c89] : memref<98xf32, #tpu.memory_space<smem>>
      %c0_159 = arith.constant 0 : index
      %c162 = arith.constant 162 : index
      %438 = vector.load %arg7[%c0_159, %c162] : memref<2x512xf32, #tpu.memory_space<vmem>>, vector<1x256xf32>
      %439 = vector.broadcast %436 : f32 to vector<1x256xf32>
      %440 = arith.mulf %439, %438 : vector<1x256xf32>
      %441 = arith.addf %435, %440 : vector<1x256xf32>
      %c1_160 = arith.constant 1 : index
      %c162_161 = arith.constant 162 : index
      %442 = vector.load %arg7[%c1_160, %c162_161] : memref<2x512xf32, #tpu.memory_space<vmem>>, vector<1x256xf32>
      %443 = vector.broadcast %437 : f32 to vector<1x256xf32>
      %444 = arith.mulf %443, %442 : vector<1x256xf32>
      %445 = arith.addf %441, %444 : vector<1x256xf32>
      %c47 = arith.constant 47 : index
      %446 = memref.load %arg2[%c47] : memref<98xf32, #tpu.memory_space<smem>>
      %c96_162 = arith.constant 96 : index
      %447 = memref.load %arg2[%c96_162] : memref<98xf32, #tpu.memory_space<smem>>
      %c0_163 = arith.constant 0 : index
      %c178 = arith.constant 178 : index
      %448 = vector.load %arg7[%c0_163, %c178] : memref<2x512xf32, #tpu.memory_space<vmem>>, vector<1x256xf32>
      %449 = vector.broadcast %446 : f32 to vector<1x256xf32>
      %450 = arith.mulf %449, %448 : vector<1x256xf32>
      %451 = arith.addf %445, %450 : vector<1x256xf32>
      %c1_164 = arith.constant 1 : index
      %c178_165 = arith.constant 178 : index
      %452 = vector.load %arg7[%c1_164, %c178_165] : memref<2x512xf32, #tpu.memory_space<vmem>>, vector<1x256xf32>
      %453 = vector.broadcast %447 : f32 to vector<1x256xf32>
      %454 = arith.mulf %453, %452 : vector<1x256xf32>
      %455 = arith.addf %451, %454 : vector<1x256xf32>
      %456 = arith.mulf %384, %455 : vector<1x256xf32>
      %457 = arith.addf %383, %456 : vector<1x256xf32>
      %c6 = arith.constant 6 : index
      %c0_166 = arith.constant 0 : index
      %458 = vector.load %arg3[%c6, %c0_166] : memref<7x256xf32, #tpu.memory_space<vmem>>, vector<1x256xf32>
      %cst_167 = arith.constant 0.000000e+00 : f32
      %459 = vector.broadcast %cst_167 : f32 to vector<1x256xf32>
      %c6_168 = arith.constant 6 : index
      %460 = memref.load %arg2[%c6_168] : memref<98xf32, #tpu.memory_space<smem>>
      %c55 = arith.constant 55 : index
      %461 = memref.load %arg2[%c55] : memref<98xf32, #tpu.memory_space<smem>>
      %c0_169 = arith.constant 0 : index
      %c83 = arith.constant 83 : index
      %462 = vector.load %arg7[%c0_169, %c83] : memref<2x512xf32, #tpu.memory_space<vmem>>, vector<1x256xf32>
      %463 = vector.broadcast %460 : f32 to vector<1x256xf32>
      %464 = arith.mulf %463, %462 : vector<1x256xf32>
      %465 = arith.addf %459, %464 : vector<1x256xf32>
      %c1_170 = arith.constant 1 : index
      %c83_171 = arith.constant 83 : index
      %466 = vector.load %arg7[%c1_170, %c83_171] : memref<2x512xf32, #tpu.memory_space<vmem>>, vector<1x256xf32>
      %467 = vector.broadcast %461 : f32 to vector<1x256xf32>
      %468 = arith.mulf %467, %466 : vector<1x256xf32>
      %469 = arith.addf %465, %468 : vector<1x256xf32>
      %c13 = arith.constant 13 : index
      %470 = memref.load %arg2[%c13] : memref<98xf32, #tpu.memory_space<smem>>
      %c62 = arith.constant 62 : index
      %471 = memref.load %arg2[%c62] : memref<98xf32, #tpu.memory_space<smem>>
      %c0_172 = arith.constant 0 : index
      %c99 = arith.constant 99 : index
      %472 = vector.load %arg7[%c0_172, %c99] : memref<2x512xf32, #tpu.memory_space<vmem>>, vector<1x256xf32>
      %473 = vector.broadcast %470 : f32 to vector<1x256xf32>
      %474 = arith.mulf %473, %472 : vector<1x256xf32>
      %475 = arith.addf %469, %474 : vector<1x256xf32>
      %c1_173 = arith.constant 1 : index
      %c99_174 = arith.constant 99 : index
      %476 = vector.load %arg7[%c1_173, %c99_174] : memref<2x512xf32, #tpu.memory_space<vmem>>, vector<1x256xf32>
      %477 = vector.broadcast %471 : f32 to vector<1x256xf32>
      %478 = arith.mulf %477, %476 : vector<1x256xf32>
      %479 = arith.addf %475, %478 : vector<1x256xf32>
      %c20 = arith.constant 20 : index
      %480 = memref.load %arg2[%c20] : memref<98xf32, #tpu.memory_space<smem>>
      %c69 = arith.constant 69 : index
      %481 = memref.load %arg2[%c69] : memref<98xf32, #tpu.memory_space<smem>>
      %c0_175 = arith.constant 0 : index
      %c115 = arith.constant 115 : index
      %482 = vector.load %arg7[%c0_175, %c115] : memref<2x512xf32, #tpu.memory_space<vmem>>, vector<1x256xf32>
      %483 = vector.broadcast %480 : f32 to vector<1x256xf32>
      %484 = arith.mulf %483, %482 : vector<1x256xf32>
      %485 = arith.addf %479, %484 : vector<1x256xf32>
      %c1_176 = arith.constant 1 : index
      %c115_177 = arith.constant 115 : index
      %486 = vector.load %arg7[%c1_176, %c115_177] : memref<2x512xf32, #tpu.memory_space<vmem>>, vector<1x256xf32>
      %487 = vector.broadcast %481 : f32 to vector<1x256xf32>
      %488 = arith.mulf %487, %486 : vector<1x256xf32>
      %489 = arith.addf %485, %488 : vector<1x256xf32>
      %c27 = arith.constant 27 : index
      %490 = memref.load %arg2[%c27] : memref<98xf32, #tpu.memory_space<smem>>
      %c76 = arith.constant 76 : index
      %491 = memref.load %arg2[%c76] : memref<98xf32, #tpu.memory_space<smem>>
      %c0_178 = arith.constant 0 : index
      %c131 = arith.constant 131 : index
      %492 = vector.load %arg7[%c0_178, %c131] : memref<2x512xf32, #tpu.memory_space<vmem>>, vector<1x256xf32>
      %493 = vector.broadcast %490 : f32 to vector<1x256xf32>
      %494 = arith.mulf %493, %492 : vector<1x256xf32>
      %495 = arith.addf %489, %494 : vector<1x256xf32>
      %c1_179 = arith.constant 1 : index
      %c131_180 = arith.constant 131 : index
      %496 = vector.load %arg7[%c1_179, %c131_180] : memref<2x512xf32, #tpu.memory_space<vmem>>, vector<1x256xf32>
      %497 = vector.broadcast %491 : f32 to vector<1x256xf32>
      %498 = arith.mulf %497, %496 : vector<1x256xf32>
      %499 = arith.addf %495, %498 : vector<1x256xf32>
      %c34 = arith.constant 34 : index
      %500 = memref.load %arg2[%c34] : memref<98xf32, #tpu.memory_space<smem>>
      %c83_181 = arith.constant 83 : index
      %501 = memref.load %arg2[%c83_181] : memref<98xf32, #tpu.memory_space<smem>>
      %c0_182 = arith.constant 0 : index
      %c147 = arith.constant 147 : index
      %502 = vector.load %arg7[%c0_182, %c147] : memref<2x512xf32, #tpu.memory_space<vmem>>, vector<1x256xf32>
      %503 = vector.broadcast %500 : f32 to vector<1x256xf32>
      %504 = arith.mulf %503, %502 : vector<1x256xf32>
      %505 = arith.addf %499, %504 : vector<1x256xf32>
      %c1_183 = arith.constant 1 : index
      %c147_184 = arith.constant 147 : index
      %506 = vector.load %arg7[%c1_183, %c147_184] : memref<2x512xf32, #tpu.memory_space<vmem>>, vector<1x256xf32>
      %507 = vector.broadcast %501 : f32 to vector<1x256xf32>
      %508 = arith.mulf %507, %506 : vector<1x256xf32>
      %509 = arith.addf %505, %508 : vector<1x256xf32>
      %c41 = arith.constant 41 : index
      %510 = memref.load %arg2[%c41] : memref<98xf32, #tpu.memory_space<smem>>
      %c90 = arith.constant 90 : index
      %511 = memref.load %arg2[%c90] : memref<98xf32, #tpu.memory_space<smem>>
      %c0_185 = arith.constant 0 : index
      %c163 = arith.constant 163 : index
      %512 = vector.load %arg7[%c0_185, %c163] : memref<2x512xf32, #tpu.memory_space<vmem>>, vector<1x256xf32>
      %513 = vector.broadcast %510 : f32 to vector<1x256xf32>
      %514 = arith.mulf %513, %512 : vector<1x256xf32>
      %515 = arith.addf %509, %514 : vector<1x256xf32>
      %c1_186 = arith.constant 1 : index
      %c163_187 = arith.constant 163 : index
      %516 = vector.load %arg7[%c1_186, %c163_187] : memref<2x512xf32, #tpu.memory_space<vmem>>, vector<1x256xf32>
      %517 = vector.broadcast %511 : f32 to vector<1x256xf32>
      %518 = arith.mulf %517, %516 : vector<1x256xf32>
      %519 = arith.addf %515, %518 : vector<1x256xf32>
      %c48 = arith.constant 48 : index
      %520 = memref.load %arg2[%c48] : memref<98xf32, #tpu.memory_space<smem>>
      %c97_188 = arith.constant 97 : index
      %521 = memref.load %arg2[%c97_188] : memref<98xf32, #tpu.memory_space<smem>>
      %c0_189 = arith.constant 0 : index
      %c179 = arith.constant 179 : index
      %522 = vector.load %arg7[%c0_189, %c179] : memref<2x512xf32, #tpu.memory_space<vmem>>, vector<1x256xf32>
      %523 = vector.broadcast %520 : f32 to vector<1x256xf32>
      %524 = arith.mulf %523, %522 : vector<1x256xf32>
      %525 = arith.addf %519, %524 : vector<1x256xf32>
      %c1_190 = arith.constant 1 : index
      %c179_191 = arith.constant 179 : index
      %526 = vector.load %arg7[%c1_190, %c179_191] : memref<2x512xf32, #tpu.memory_space<vmem>>, vector<1x256xf32>
      %527 = vector.broadcast %521 : f32 to vector<1x256xf32>
      %528 = arith.mulf %527, %526 : vector<1x256xf32>
      %529 = arith.addf %525, %528 : vector<1x256xf32>
      %530 = arith.mulf %458, %529 : vector<1x256xf32>
      %531 = arith.addf %457, %530 : vector<1x256xf32>
      %532 = arith.negf %531 : vector<1x256xf32>
      %533 = math.exp %532 : vector<1x256xf32>
      %cst_192 = arith.constant 1.000000e+00 : f32
      %534 = vector.broadcast %cst_192 : f32 to vector<1x256xf32>
      %535 = arith.addf %534, %533 : vector<1x256xf32>
      %536 = arith.divf %534, %535 : vector<1x256xf32>
      %c0_193 = arith.constant 0 : index
      %c0_194 = arith.constant 0 : index
      %c0_195 = arith.constant 0 : index
      %537 = vector.load %arg5[%c0_193, %c0_194, %c0_195] : memref<1x1x256xf32, #tpu.memory_space<vmem>>, vector<1x1x256xf32>
      %538 = vector.shape_cast %537 : vector<1x1x256xf32> to vector<1x256xf32>
      %539 = vector.shape_cast %536 : vector<1x256xf32> to vector<1x1x256xf32>
      tpu.vector_store %arg5[%c0_193, %c0_194, %c0_195], %539 {strides = array<i32>} : memref<1x1x256xf32, #tpu.memory_space<vmem>>, vector<1x1x256xf32>,
    } else {
    }
    return
  }
  func.func @transform_0(%arg0: i32, %arg1: i32) -> i32 {
    %c0_i32 = arith.constant 0 : i32
    %c0_i32_0 = arith.constant 0 : i32
    return %c0_i32 : i32
  }
  func.func @transform_1(%arg0: i32, %arg1: i32) -> (i32, i32) {
    %c0_i32 = arith.constant 0 : i32
    %c0_i32_0 = arith.constant 0 : i32
    %c0_i32_1 = arith.constant 0 : i32
    return %c0_i32, %c0_i32_0 : i32, i32
  }
  func.func @transform_2(%arg0: i32, %arg1: i32) -> (i32, i32, i32) {
    %c0_i32 = arith.constant 0 : i32
    %c0_i32_0 = arith.constant 0 : i32
    return %arg0, %arg1, %c0_i32 : i32, i32, i32
  }
  func.func @transform_3(%arg0: i32, %arg1: i32) -> (i32, i32, i32) {
    %c0_i32 = arith.constant 0 : i32
    %c0_i32_0 = arith.constant 0 : i32
    %c0_i32_1 = arith.constant 0 : i32
    return %arg0, %c0_i32, %c0_i32_0 : i32, i32, i32
  }
}

</mosaic_0001>

<llo_original>
// kernel: tpu_custom_call.1
$region0: #{tpu_custom_call.1}
  #allocation0 [shape = 'u32[]', space=smem, size = 0x4, offset = 0x4, fixed_abs, tag = 'smem constant byte address 0x4 - core index']
  #allocation1 [shape = 'u32[144,128]{1,0:T(1,128)}', space=vmem, size = 0x12000, scoped, tag = 'internal scratch']
  #allocation2 [shape = 'f32[2,256]{1,0:T(2,128)}', space=vmem, size = 0x800, scoped, tag = 'scratch operand']
  #allocation3 [shape = 'f32[2,512]{1,0:T(2,128)}', space=vmem, size = 0x1000, scoped, tag = 'scratch operand']
  %s0 = inlined_call_operand.hbm [shape: f32[98], index: 0, kind: input, shape index: {}]
  %s1 = inlined_call_operand.hbm [shape: f32[7,256], index: 1, kind: input, shape index: {}]
  %s2 = inlined_call_operand.hbm [shape: f32[2,4,256], index: 2, kind: input, shape index: {}]
  %s3 = inlined_call_operand.hbm [shape: f32[2,1,256], index: 3, kind: output, shape index: {}]
  %s4 = sld [smem:[#allocation0]]
  $region69: #{tpu_custom_call.1} parent=0
    _
  %s6 = ssub.s32 1, %s4
  %s7 = scalar_select 0, %s6, %s4
  $region1: #{tpu_custom_call.1} parent=0
    #allocation4 [shape = 'u8[512]{0}', space=smem, size = 0x200, scoped, tag = 'input window, operand 0, single buffered']
    #allocation5 [shape = 's32[2]{0}', space=sflag, size = 0x8, scoped, tag = 'scoped memory for tpu_custom_call.1']
    #allocation6 [shape = 's32[2]{0}', space=sflag, size = 0x8, scoped, tag = 'scoped memory for tpu_custom_call.1']
    #allocation7 [shape = 's32[2]{0}', space=sflag, size = 0x8, scoped, tag = 'scoped memory for tpu_custom_call.1']
    #allocation8 [shape = 'u8[8192]{0}', space=vmem, size = 0x2000, scoped, tag = 'input window, operand 1, single buffered']
    #allocation9 [shape = 'u8[8192]{0}', space=vmem, size = 0x2000, scoped, tag = 'input window, operand 2']
    #allocation10 [shape = 's32[2]{0}', space=sflag, size = 0x8, scoped, tag = 'scoped memory for tpu_custom_call.1']
    #allocation11 [shape = 'u8[2048]{0}', space=vmem, size = 0x800, scoped, tag = 'output window, operand 0']
    %8 = vsyncpa [#allocation7], 0
    %9 = vsyncpa [#allocation5], 0
    %10 = vsyncpa [#allocation10], 0
    %s11 = scalar_lea.sflag [#allocation10], 1
    %12 = vsyncpa %s11, 0
    %13 = vsyncpa [#allocation6], 0
    %s14 = scalar_lea.sflag [#allocation6], 1
    %15 = vsyncpa %s14, 0
    loop: start=0, step=1, limit=4
    $region2: #{tpu_custom_call.1} parent=1 // loop_pre_header
      _
    $region3: #{tpu_custom_call.1} parent=1 // loop_header
      %s17 = sphi 0, %s21
      %p18 = scmp.ge.s32.totalorder %s17, 4
      %s24 = sphi 0, %s36
      %s25 = sphi 0, %s32
      %s26 = sphi 0, %s24
      %s27 = sphi 0, %s25
      %s28 = sphi 0, %s26
      %s29 = sphi 0, %s27
      %s37 = sphi 0, %s37
      %s39 = sphi 0, %s37
      %s40 = sphi 0, %s39
      %s54 = sphi 0, %s40
      %s58 = sphi 0, %s58
      %s60 = sphi 0, %s58
      %s61 = sphi 0, %s60
      %s75 = sphi 0, %s61
      %s83 = sphi 0, %s85
      %s86 = sphi 0, %s83
      %s87 = sphi 0, %s86
      %s103 = sphi 0, %s87
      %s109 = sphi 0, %s111
      %s112 = sphi 0, %s109
      %s113 = sphi 0, %s112
      %s129 = sphi 0, %s113
    $region4: #{tpu_custom_call.1} parent=1 // loop_header_branch
      %20 = sbr.rel (%p18) target = $region8
    $region5: #{tpu_custom_call.1} parent=1 // loop_body
      %s22 = ssub.s32 %s17, 1
      %s23 = ssub.s32 %s17, 2
      %s30 = sadd.s32 1, %s25
      %p31 = scmp.ge.s32.totalorder %s30, 1
      %s32 = scalar_select %p31, 0, %s30
      %s33 = sadd.s32 1, %s24
      %s34 = scalar_select %p31, %s33, %s24
      %p35 = scmp.ge.s32.totalorder %s34, 2
      %s36 = scalar_select %p35, 0, %s34
      %s38 = sadd.s32 %s37, 1
      %p41 = scmp.eq.s32.totalorder %s17, 1
      %p42 = scmp.ne.s32.totalorder %s37, %s39
      %p43 = scmp.eq.s32.totalorder %s17, 0
      %p44 = por %p42, %p43
      %p45 = scmp.ne.s32.totalorder %s37, %s39
      %p46 = scmp.eq.s32.totalorder %s22, 1
      %p47 = por %p45, %p46
      %p48 = scmp.ne.s32.totalorder %s39, %s40
      %p49 = scmp.eq.s32.totalorder %s22, 0
      %p50 = por %p48, %p49
      %p51 = scmp.ne.s32.totalorder %s39, %s40
      %p52 = scmp.eq.s32.totalorder %s23, 1
      %p53 = por %p51, %p52
      %p55 = scmp.ne.s32.totalorder %s40, %s54
      %p56 = scmp.eq.s32.totalorder %s23, 0
      %p57 = por %p55, %p56
      %s59 = sadd.s32 %s58, 1
      %p62 = scmp.eq.s32.totalorder %s17, 1
      %p63 = scmp.ne.s32.totalorder %s58, %s60
      %p64 = scmp.eq.s32.totalorder %s17, 0
      %p65 = por %p63, %p64
      %p66 = scmp.ne.s32.totalorder %s58, %s60
      %p67 = scmp.eq.s32.totalorder %s22, 1
      %p68 = por %p66, %p67
      %p69 = scmp.ne.s32.totalorder %s60, %s61
      %p70 = scmp.eq.s32.totalorder %s22, 0
      %p71 = por %p69, %p70
      %p72 = scmp.ne.s32.totalorder %s60, %s61
      %p73 = scmp.eq.s32.totalorder %s23, 1
      %p74 = por %p72, %p73
      %p76 = scmp.ne.s32.totalorder %s61, %s75
      %p77 = scmp.eq.s32.totalorder %s23, 0
      %p78 = por %p76, %p77
      %s79 = ssub.s32 %s24, %s36
      %s80 = ssub.s32 %s25, %s32
      %s81 = sor.u32 %s79, %s80
      %p82 = scmp.eq.s32.totalorder %s81, 0
      %s84 = sadd.s32 %s83, 1
      %s85 = scalar_select %p82, %s83, %s84
      %p88 = pneg %p82
      %p89 = scmp.eq.s32.totalorder %s17, 1
      %p90 = por %p88, %p89
      %p91 = scmp.ne.s32.totalorder %s83, %s86
      %p92 = scmp.eq.s32.totalorder %s17, 0
      %p93 = por %p91, %p92
      %p94 = scmp.ne.s32.totalorder %s83, %s86
      %p95 = scmp.eq.s32.totalorder %s22, 1
      %p96 = por %p94, %p95
      %p97 = scmp.ne.s32.totalorder %s86, %s87
      %p98 = scmp.eq.s32.totalorder %s22, 0
      %p99 = por %p97, %p98
      %p100 = scmp.ne.s32.totalorder %s86, %s87
      %p101 = scmp.eq.s32.totalorder %s23, 1
      %p102 = por %p100, %p101
      %p104 = scmp.ne.s32.totalorder %s87, %s103
      %p105 = scmp.eq.s32.totalorder %s23, 0
      %p106 = por %p104, %p105
      %s107 = ssub.s32 %s24, %s36
      %p108 = scmp.eq.s32.totalorder %s107, 0
      %s110 = sadd.s32 %s109, 1
      %s111 = scalar_select %p108, %s109, %s110
      %p114 = pneg %p108
      %p115 = scmp.eq.s32.totalorder %s17, 1
      %p116 = por %p114, %p115
      %p117 = scmp.ne.s32.totalorder %s109, %s112
      %p118 = scmp.eq.s32.totalorder %s17, 0
      %p119 = por %p117, %p118
      %p120 = scmp.ne.s32.totalorder %s109, %s112
      %p121 = scmp.eq.s32.totalorder %s22, 1
      %p122 = por %p120, %p121
      %p123 = scmp.ne.s32.totalorder %s112, %s113
      %p124 = scmp.eq.s32.totalorder %s22, 0
      %p125 = por %p123, %p124
      %p126 = scmp.ne.s32.totalorder %s112, %s113
      %p127 = scmp.eq.s32.totalorder %s23, 1
      %p128 = por %p126, %p127
      %p130 = scmp.ne.s32.totalorder %s113, %s129
      %p131 = scmp.eq.s32.totalorder %s23, 0
      %p132 = por %p130, %p131
      %p133 = scmp.le.s32.totalorder 1, %s17
      %p134 = scmp.lt.s32.totalorder %s17, 3
      %p135 = pnand %p133, %p134
      %p136 = pneg %p135
      // Predicated region
      $region9: #{tpu_custom_call.1} parent=5 // pred_check
        _
      $region10: #{tpu_custom_call.1} parent=5 // pred_check_branch
        %138 = sbr.rel (%p135) target = $region12
      $region11: #{tpu_custom_call.1} parent=5 // pred_region
        %s139 = ssub.s32 %s17, 1
        // Predicated region
        $region13: #{tpu_custom_call.1} parent=11 // pred_check
          %p140 = pneg %p50
        $region14: #{tpu_custom_call.1} parent=11 // pred_check_branch
          %142 = sbr.rel (%p140) target = $region16
        $region15: #{tpu_custom_call.1} parent=11 // pred_region
          %s144 = ssub.s32 16, 16
          %145 = vsyncadd [#allocation7], %s144
          %148 = dma.hbm_to_smem %s0, 16, [#allocation4], [#allocation7]
        $region16: #{tpu_custom_call.1} parent=11 // pred_fallthru
          _
        // Predicated region
        $region17: #{tpu_custom_call.1} parent=11 // pred_check
          %p149 = pneg %p71
        $region18: #{tpu_custom_call.1} parent=11 // pred_check_branch
          %151 = sbr.rel (%p149) target = $region20
        $region19: #{tpu_custom_call.1} parent=11 // pred_region
          %s153 = ssub.s32 256, 256
          %154 = vsyncadd [#allocation5], %s153
          %s156 = sshll.u32 [#allocation8], 4
          %s157 = int_to_ptr.vmem [resolvable:$true] %s156
          %159 = dma.hbm_to_vmem [thread:$0]  %s1, 256, %s157, [#allocation5]
        $region20: #{tpu_custom_call.1} parent=11 // pred_fallthru
          _
      $region12: #{tpu_custom_call.1} parent=5 // pred_fallthru
        _
      %p160 = scmp.lt.s32.totalorder %s17, 2
      // Predicated region
      $region21: #{tpu_custom_call.1} parent=5 // pred_check
        %p161 = pneg %p160
      $region22: #{tpu_custom_call.1} parent=5 // pred_check_branch
        %163 = sbr.rel (%p161) target = $region24
      $region23: #{tpu_custom_call.1} parent=5 // pred_region
        // Predicated region
        $region25: #{tpu_custom_call.1} parent=23 // pred_check
          %p164 = pneg %p93
        $region26: #{tpu_custom_call.1} parent=23 // pred_check_branch
          %166 = sbr.rel (%p164) target = $region28
        $region27: #{tpu_custom_call.1} parent=23 // pred_region
          %s167 = sand.u32 %s83, 1
          %s168 = scalar_lea.sflag [#allocation10], %s167
          %s169 = sand.u32 %s83, 1
          %s170 = smul.addr %s169, 8
          %s171 = scalar_lea.vmem [#allocation9], %s170
          %s173 = ssub.s32 128, 128
          %174 = vsyncadd %s168, %s173
          %s175 = smul.addr %s25, 2
          %s176 = smul.addr %s24, 2
          %s177 = sadd.s32 %s175, %s176
          %s178 = smul.addr %s177, 64
          %s179 = scalar_lea.hbm %s2, %s178
          %s181 = sshll.u32 %s171, 4
          %s182 = int_to_ptr.vmem [resolvable:$true] %s181
          %184 = dma.hbm_to_vmem [thread:$0]  %s179, 128, %s182, %s168
        $region28: #{tpu_custom_call.1} parent=23 // pred_fallthru
          _
      $region24: #{tpu_custom_call.1} parent=5 // pred_fallthru
        _
      %p185 = scmp.le.s32.totalorder 1, %s17
      %p186 = scmp.lt.s32.totalorder %s17, 3
      %p187 = pnand %p185, %p186
      %p188 = pneg %p187
      // Predicated region
      $region29: #{tpu_custom_call.1} parent=5 // pred_check
        _
      $region30: #{tpu_custom_call.1} parent=5 // pred_check_branch
        %190 = sbr.rel (%p187) target = $region32
      $region31: #{tpu_custom_call.1} parent=5 // pred_region
        %s191 = ssub.s32 %s17, 1
        // Predicated region
        $region33: #{tpu_custom_call.1} parent=31 // pred_check
          %p192 = pneg %p50
        $region34: #{tpu_custom_call.1} parent=31 // pred_check_branch
          %194 = sbr.rel (%p192) target = $region36
        $region35: #{tpu_custom_call.1} parent=31 // pred_region
          %195 = dma.done [#allocation7], 16
        $region36: #{tpu_custom_call.1} parent=31 // pred_fallthru
          _
        // Predicated region
        $region37: #{tpu_custom_call.1} parent=31 // pred_check
          %p196 = pneg %p71
        $region38: #{tpu_custom_call.1} parent=31 // pred_check_branch
          %198 = sbr.rel (%p196) target = $region40
        $region39: #{tpu_custom_call.1} parent=31 // pred_region
          %199 = dma.done [#allocation5], 256
        $region40: #{tpu_custom_call.1} parent=31 // pred_fallthru
          _
        %s200 = sand.u32 %s86, 1
        %s201 = scalar_lea.sflag [#allocation10], %s200
        %s202 = sand.u32 %s86, 1
        %s203 = smul.addr %s202, 8
        %s204 = scalar_lea.vmem [#allocation9], %s203
        // Predicated region
        $region41: #{tpu_custom_call.1} parent=31 // pred_check
          %p205 = pneg %p99
        $region42: #{tpu_custom_call.1} parent=31 // pred_check_branch
          %207 = sbr.rel (%p205) target = $region44
        $region43: #{tpu_custom_call.1} parent=31 // pred_region
          %208 = dma.done %s201, 128
        $region44: #{tpu_custom_call.1} parent=31 // pred_fallthru
          _
        %209 = sfence
        %p210 = pneg %p50
        %p211 = pneg %p47
        %p212 = pneg %p71
        %p213 = pneg %p68
        %s214 = sand.u32 %s86, 1
        %s215 = scalar_lea.sflag [#allocation10], %s214
        %s216 = sand.u32 %s86, 1
        %s217 = smul.addr %s216, 8
        %s218 = scalar_lea.vmem [#allocation9], %s217
        %p219 = pneg %p99
        %p220 = pneg %p96
        %p221 = pneg %p125
        %p222 = pneg %p122
        %s223 = sand.u32 %s112, 1
        %s224 = scalar_lea.sflag [#allocation6], %s223
        %s225 = sand.u32 %s112, 1
        %s226 = smul.addr %s225, 2
        %s227 = scalar_lea.vmem [#allocation11], %s226
        %p228 = scmp.eq.s32.totalorder %s27, 0
        // Predicated region
        $region45: #{tpu_custom_call.1} parent=31 // pred_check
          %p229 = pneg %p228
        $region46: #{tpu_custom_call.1} parent=31 // pred_check_branch
          %231 = sbr.rel (%p229) target = $region48
        $region47: #{tpu_custom_call.1} parent=31 // pred_region
          %v232 = vld [vmem:[%s204] sm:$0xff]
          %v234 = vcombine.high %v232, %v232
          %vm236 = vcmask 1043456
          %v237 = vsel %vm236, %v232, 0.0
          %v238 = vrot.slane %v237, 4
          %v239 = vadd.f32 %v237, %v238
          %v240 = vrot.slane %v239, 2
          %v241 = vadd.f32 %v239, %v240
          %v242 = vrot.slane %v241, 1
          %v243 = vadd.f32 %v241, %v242
          %v244 = vsel %vm236, %v234, 0.0
          %v245 = vrot.slane %v244, 4
          %v246 = vadd.f32 %v244, %v245
          %v247 = vrot.slane %v246, 2
          %v248 = vadd.f32 %v246, %v247
          %v249 = vrot.slane %v248, 1
          %v250 = vadd.f32 %v248, %v249
          %v253 = vcombine.low %v243, %v250
          %v255 = vunpack.c.l.s4 1966171168
          %v256 = vunpack.c.0.s8 %v255
          %v257 = vlaneseq
          %v258 = vshrl.u32 %v257, 7
          %v259 = vsub.s32 %v256, %v258
          %v260 = vrot.slane %v253, %v259
          %v262 = vunpack.c.l.s4 1966171168
          %v263 = vunpack.c.0.s8 %v262
          %v264 = vlaneseq
          %v265 = vshrl.u32 %v264, 7
          %v266 = vsub.s32 %v263, %v265
          %v267 = vrot.slane %v260, %v266
          %v269 = vlaneseq
          %vm270 = vcmp.ge.s32.totalorder %v269, 0
          %vm271 = vcmp.lt.s32.totalorder %v269, 256
          %vm272 = vmand %vm270, %vm271
          %273 = vst.msk [vmem:[#allocation2] ss:$2 sm:$0x3] %vm272, %v267
          %v274 = vsel %vm236, %v232, -inf
          %v275 = vrot.slane %v274, 4
          %v276 = vmax.f32 %v274, %v275
          %v277 = vrot.slane %v276, 2
          %v278 = vmax.f32 %v276, %v277
          %v279 = vrot.slane %v278, 1
          %v280 = vmax.f32 %v278, %v279
          %v281 = vsel %vm236, %v234, -inf
          %v282 = vrot.slane %v281, 4
          %v283 = vmax.f32 %v281, %v282
          %v284 = vrot.slane %v283, 2
          %v285 = vmax.f32 %v283, %v284
          %v286 = vrot.slane %v285, 1
          %v287 = vmax.f32 %v285, %v286
          %v290 = vcombine.low %v280, %v287
          %v292 = vunpack.c.l.s4 1966171168
          %v293 = vunpack.c.0.s8 %v292
          %v294 = vlaneseq
          %v295 = vshrl.u32 %v294, 7
          %v296 = vsub.s32 %v293, %v295
          %v297 = vrot.slane %v290, %v296
          %v299 = vunpack.c.l.s4 1966171168
          %v300 = vunpack.c.0.s8 %v299
          %v301 = vlaneseq
          %v302 = vshrl.u32 %v301, 7
          %v303 = vsub.s32 %v300, %v302
          %v304 = vrot.slane %v297, %v303
          %s306 = scalar_lea.vmem [#allocation2], 1
          %307 = vst.msk [vmem:[%s306] ss:$2 sm:$0x3] %vm272, %v304
        $region48: #{tpu_custom_call.1} parent=31 // pred_fallthru
          _
        %p308 = scmp.gt.s32.totalorder %s27, 0
        // Predicated region
        $region49: #{tpu_custom_call.1} parent=31 // pred_check
          %p309 = pneg %p308
        $region50: #{tpu_custom_call.1} parent=31 // pred_check_branch
          %311 = sbr.rel (%p309) target = $region52
        $region51: #{tpu_custom_call.1} parent=31 // pred_region
          %v312 = vld [vmem:[%s204] sm:$0xff]
          %v313 = vld [vmem:[#allocation2] ss:$2 sm:$0x3]
          %v315 = vcombine.high %v312, %v312
          %vm317 = vcmask 1043456
          %v318 = vsel %vm317, %v312, 0.0
          %v319 = vrot.slane %v318, 4
          %v320 = vadd.f32 %v318, %v319
          %v321 = vrot.slane %v320, 2
          %v322 = vadd.f32 %v320, %v321
          %v323 = vrot.slane %v322, 1
          %v324 = vadd.f32 %v322, %v323
          %v325 = vsel %vm317, %v315, 0.0
          %v326 = vrot.slane %v325, 4
          %v327 = vadd.f32 %v325, %v326
          %v328 = vrot.slane %v327, 2
          %v329 = vadd.f32 %v327, %v328
          %v330 = vrot.slane %v329, 1
          %v331 = vadd.f32 %v329, %v330
          %v334 = vcombine.low %v324, %v331
          %v336 = vunpack.c.l.s4 1966171168
          %v337 = vunpack.c.0.s8 %v336
          %v338 = vlaneseq
          %v339 = vshrl.u32 %v338, 7
          %v340 = vsub.s32 %v337, %v339
          %v341 = vrot.slane %v334, %v340
          %v343 = vunpack.c.l.s4 1966171168
          %v344 = vunpack.c.0.s8 %v343
          %v345 = vlaneseq
          %v346 = vshrl.u32 %v345, 7
          %v347 = vsub.s32 %v344, %v346
          %v348 = vrot.slane %v341, %v347
          %v350 = vadd.f32 %v313, %v348
          %v351 = vlaneseq
          %vm352 = vcmp.ge.s32.totalorder %v351, 0
          %vm353 = vcmp.lt.s32.totalorder %v351, 256
          %vm354 = vmand %vm352, %vm353
          %355 = vst.msk [vmem:[#allocation2] ss:$2 sm:$0x3] %vm354, %v350
          %s356 = scalar_lea.vmem [#allocation2], 1
          %v357 = vld [vmem:[%s356] ss:$2 sm:$0x3]
          %v358 = vsel %vm317, %v312, -inf
          %v359 = vrot.slane %v358, 4
          %v360 = vmax.f32 %v358, %v359
          %v361 = vrot.slane %v360, 2
          %v362 = vmax.f32 %v360, %v361
          %v363 = vrot.slane %v362, 1
          %v364 = vmax.f32 %v362, %v363
          %v365 = vsel %vm317, %v315, -inf
          %v366 = vrot.slane %v365, 4
          %v367 = vmax.f32 %v365, %v366
          %v368 = vrot.slane %v367, 2
          %v369 = vmax.f32 %v367, %v368
          %v370 = vrot.slane %v369, 1
          %v371 = vmax.f32 %v369, %v370
          %v374 = vcombine.low %v364, %v371
          %v376 = vunpack.c.l.s4 1966171168
          %v377 = vunpack.c.0.s8 %v376
          %v378 = vlaneseq
          %v379 = vshrl.u32 %v378, 7
          %v380 = vsub.s32 %v377, %v379
          %v381 = vrot.slane %v374, %v380
          %v383 = vunpack.c.l.s4 1966171168
          %v384 = vunpack.c.0.s8 %v383
          %v385 = vlaneseq
          %v386 = vshrl.u32 %v385, 7
          %v387 = vsub.s32 %v384, %v386
          %v388 = vrot.slane %v381, %v387
          %v390 = vmax.f32 %v357, %v388
          %391 = vst.msk [vmem:[%s356] ss:$2 sm:$0x3] %vm354, %v390
        $region52: #{tpu_custom_call.1} parent=31 // pred_fallthru
          _
        // Predicated region
        $region53: #{tpu_custom_call.1} parent=31 // pred_check
          %p392 = pneg %p228
        $region54: #{tpu_custom_call.1} parent=31 // pred_check_branch
          %394 = sbr.rel (%p392) target = $region56
        $region55: #{tpu_custom_call.1} parent=31 // pred_region
          %395 = vst [vmem:[#allocation3] sm:$0xff] 0.0
          %v396 = vld [vmem:[#allocation2] sm:$0xf]
          %397 = vst [vmem:[#allocation3 + $0x2] sm:$0xf] %v396
          %v398 = vld [vmem:[#allocation8] ss:$8 sm:$0x3]
          %s399 = sld [smem:[#allocation4]]
          %s400 = sld [smem:[#allocation4 + $0x31]]
          %v401 = vld [vmem:[#allocation3] ss:$2 sm:$0x7]
          %v402 = vstv %s399
          %v403 = vmul.f32 %v402, %v401
          %v404 = vadd.f32 %v403, 0.0
          %s405 = scalar_lea.vmem [#allocation3], 1
          %v406 = vld [vmem:[%s405] ss:$2 sm:$0x7]
          %v407 = vstv %s400
          %v408 = vmul.f32 %v407, %v406
          %v409 = vadd.f32 %v404, %v408
          %s410 = sld [smem:[#allocation4 + $0x7]]
          %s411 = sld [smem:[#allocation4 + $0x38]]
          %v412 = vstv %s410
          %v413 = vmul.f32 %v412, %v401
          %415 = vrot.lane.b32.xlu0 %v413, 112
          %v416 = vpop.permute.xlu0 %415
          %v417 = vrot.slane %v416, 1
          %vm418 = vcmask 916480
          %v419 = vsel %vm418, %v416, %v417
          %v421 = vadd.f32 %v409, %v419
          %v422 = vstv %s411
          %v423 = vmul.f32 %v422, %v406
          %425 = vrot.lane.b32.xlu0 %v423, 112
          %v426 = vpop.permute.xlu0 %425
          %v427 = vrot.slane %v426, 1
          %v428 = vsel %vm418, %v426, %v427
          %v430 = vadd.f32 %v421, %v428
          %s431 = sld [smem:[#allocation4 + $0xe]]
          %s432 = sld [smem:[#allocation4 + $0x3f]]
          %v433 = vstv %s431
          %v434 = vmul.f32 %v433, %v401
          %436 = vrot.lane.b32.xlu0 %v434, 96
          %v437 = vpop.permute.xlu0 %436
          %v438 = vrot.slane %v437, 1
          %vm439 = vcmask 785408
          %v440 = vsel %vm439, %v437, %v438
          %v442 = vadd.f32 %v430, %v440
          %v443 = vstv %s432
          %v444 = vmul.f32 %v443, %v406
          %446 = vrot.lane.b32.xlu0 %v444, 96
          %v447 = vpop.permute.xlu0 %446
          %v448 = vrot.slane %v447, 1
          %v449 = vsel %vm439, %v447, %v448
          %v451 = vadd.f32 %v442, %v449
          %s452 = sld [smem:[#allocation4 + $0x15]]
          %s453 = sld [smem:[#allocation4 + $0x46]]
          %v454 = vstv %s452
          %v455 = vmul.f32 %v454, %v401
          %457 = vrot.lane.b32.xlu0 %v455, 80
          %v458 = vpop.permute.xlu0 %457
          %v459 = vrot.slane %v458, 1
          %vm460 = vcmask 654336
          %v461 = vsel %vm460, %v458, %v459
          %v463 = vadd.f32 %v451, %v461
          %v464 = vstv %s453
          %v465 = vmul.f32 %v464, %v406
          %467 = vrot.lane.b32.xlu0 %v465, 80
          %v468 = vpop.permute.xlu0 %467
          %v469 = vrot.slane %v468, 1
          %v470 = vsel %vm460, %v468, %v469
          %v472 = vadd.f32 %v463, %v470
          %s473 = sld [smem:[#allocation4 + $0x1c]]
          %s474 = sld [smem:[#allocation4 + $0x4d]]
          %s475 = scalar_lea.vmem [#allocation3], 2
          %v476 = vld [vmem:[%s475] ss:$2 sm:$0x7]
          %v477 = vstv %s473
          %v478 = vmul.f32 %v477, %v476
          %480 = vrot.lane.b32.xlu0 %v478, 64
          %v481 = vpop.permute.xlu0 %480
          %v482 = vrot.slane %v481, 7
          %vm483 = vcmask 523264
          %v484 = vsel %vm483, %v482, %v481
          %v486 = vadd.f32 %v472, %v484
          %s487 = scalar_lea.vmem [#allocation3], 3
          %v488 = vld [vmem:[%s487] ss:$2 sm:$0x7]
          %v489 = vstv %s474
          %v490 = vmul.f32 %v489, %v488
          %492 = vrot.lane.b32.xlu0 %v490, 64
          %v493 = vpop.permute.xlu0 %492
          %v494 = vrot.slane %v493, 7
          %v495 = vsel %vm483, %v494, %v493
          %v497 = vadd.f32 %v486, %v495
          %s498 = sld [smem:[#allocation4 + $0x23]]
          %s499 = sld [smem:[#allocation4 + $0x54]]
          %v500 = vstv %s498
          %v501 = vmul.f32 %v500, %v476
          %503 = vrot.lane.b32.xlu0 %v501, 48
          %v504 = vpop.permute.xlu0 %503
          %v505 = vrot.slane %v504, 7
          %vm506 = vcmask 392192
          %v507 = vsel %vm506, %v505, %v504
          %v509 = vadd.f32 %v497, %v507
          %v510 = vstv %s499
          %v511 = vmul.f32 %v510, %v488
          %513 = vrot.lane.b32.xlu0 %v511, 48
          %v514 = vpop.permute.xlu0 %513
          %v515 = vrot.slane %v514, 7
          %v516 = vsel %vm506, %v515, %v514
          %v518 = vadd.f32 %v509, %v516
          %s519 = sld [smem:[#allocation4 + $0x2a]]
          %s520 = sld [smem:[#allocation4 + $0x5b]]
          %v521 = vstv %s519
          %v522 = vmul.f32 %v521, %v476
          %524 = vrot.lane.b32.xlu0 %v522, 32
          %v525 = vpop.permute.xlu0 %524
          %v526 = vrot.slane %v525, 7
          %vm527 = vcmask 261120
          %v528 = vsel %vm527, %v526, %v525
          %v530 = vadd.f32 %v518, %v528
          %v531 = vstv %s520
          %v532 = vmul.f32 %v531, %v488
          %534 = vrot.lane.b32.xlu0 %v532, 32
          %v535 = vpop.permute.xlu0 %534
          %v536 = vrot.slane %v535, 7
          %v537 = vsel %vm527, %v536, %v535
          %v539 = vadd.f32 %v530, %v537
          %541 = vrot.lane.b32.xlu0 %v539, 51
          %v542 = vpop.permute.xlu0 %541
          %v543 = vrot.slane %v542, 1
          %vm544 = vcmask 416768
          %v545 = vsel %vm544, %v542, %v543
          %v547 = vmul.f32 %v398, %v545
          %v548 = vadd.f32 %v547, 0.0
          %s549 = scalar_lea.vmem [#allocation8], 1
          %v550 = vld [vmem:[%s549] ss:$8 sm:$0x3]
          %s551 = sld [smem:[#allocation4 + $0x1]]
          %s552 = sld [smem:[#allocation4 + $0x32]]
          %v553 = vstv %s551
          %v554 = vmul.f32 %v553, %v401
          %v555 = vadd.f32 %v554, 0.0
          %v556 = vstv %s552
          %v557 = vmul.f32 %v556, %v406
          %v558 = vadd.f32 %v555, %v557
          %s559 = sld [smem:[#allocation4 + $0x8]]
          %s560 = sld [smem:[#allocation4 + $0x39]]
          %v561 = vstv %s559
          %v562 = vmul.f32 %v561, %v401
          %564 = vrot.lane.b32.xlu0 %v562, 112
          %v565 = vpop.permute.xlu0 %564
          %v566 = vrot.slane %v565, 1
          %v567 = vsel %vm418, %v565, %v566
          %v569 = vadd.f32 %v558, %v567
          %v570 = vstv %s560
          %v571 = vmul.f32 %v570, %v406
          %573 = vrot.lane.b32.xlu0 %v571, 112
          %v574 = vpop.permute.xlu0 %573
          %v575 = vrot.slane %v574, 1
          %v576 = vsel %vm418, %v574, %v575
          %v578 = vadd.f32 %v569, %v576
          %s579 = sld [smem:[#allocation4 + $0xf]]
          %s580 = sld [smem:[#allocation4 + $0x40]]
          %v581 = vstv %s579
          %v582 = vmul.f32 %v581, %v401
          %584 = vrot.lane.b32.xlu0 %v582, 96
          %v585 = vpop.permute.xlu0 %584
          %v586 = vrot.slane %v585, 1
          %v587 = vsel %vm439, %v585, %v586
          %v589 = vadd.f32 %v578, %v587
          %v590 = vstv %s580
          %v591 = vmul.f32 %v590, %v406
          %593 = vrot.lane.b32.xlu0 %v591, 96
          %v594 = vpop.permute.xlu0 %593
          %v595 = vrot.slane %v594, 1
          %v596 = vsel %vm439, %v594, %v595
          %v598 = vadd.f32 %v589, %v596
          %s599 = sld [smem:[#allocation4 + $0x16]]
          %s600 = sld [smem:[#allocation4 + $0x47]]
          %v601 = vstv %s599
          %v602 = vmul.f32 %v601, %v401
          %604 = vrot.lane.b32.xlu0 %v602, 80
          %v605 = vpop.permute.xlu0 %604
          %v606 = vrot.slane %v605, 1
          %v607 = vsel %vm460, %v605, %v606
          %v609 = vadd.f32 %v598, %v607
          %v610 = vstv %s600
          %v611 = vmul.f32 %v610, %v406
          %613 = vrot.lane.b32.xlu0 %v611, 80
          %v614 = vpop.permute.xlu0 %613
          %v615 = vrot.slane %v614, 1
          %v616 = vsel %vm460, %v614, %v615
          %v618 = vadd.f32 %v609, %v616
          %s619 = sld [smem:[#allocation4 + $0x1d]]
          %s620 = sld [smem:[#allocation4 + $0x4e]]
          %v621 = vstv %s619
          %v622 = vmul.f32 %v621, %v476
          %624 = vrot.lane.b32.xlu0 %v622, 64
          %v625 = vpop.permute.xlu0 %624
          %v626 = vrot.slane %v625, 7
          %v627 = vsel %vm483, %v626, %v625
          %v629 = vadd.f32 %v618, %v627
          %v630 = vstv %s620
          %v631 = vmul.f32 %v630, %v488
          %633 = vrot.lane.b32.xlu0 %v631, 64
          %v634 = vpop.permute.xlu0 %633
          %v635 = vrot.slane %v634, 7
          %v636 = vsel %vm483, %v635, %v634
          %v638 = vadd.f32 %v629, %v636
          %s639 = sld [smem:[#allocation4 + $0x24]]
          %s640 = sld [smem:[#allocation4 + $0x55]]
          %v641 = vstv %s639
          %v642 = vmul.f32 %v641, %v476
          %644 = vrot.lane.b32.xlu0 %v642, 48
          %v645 = vpop.permute.xlu0 %644
          %v646 = vrot.slane %v645, 7
          %v647 = vsel %vm506, %v646, %v645
          %v649 = vadd.f32 %v638, %v647
          %v650 = vstv %s640
          %v651 = vmul.f32 %v650, %v488
          %653 = vrot.lane.b32.xlu0 %v651, 48
          %v654 = vpop.permute.xlu0 %653
          %v655 = vrot.slane %v654, 7
          %v656 = vsel %vm506, %v655, %v654
          %v658 = vadd.f32 %v649, %v656
          %s659 = sld [smem:[#allocation4 + $0x2b]]
          %s660 = sld [smem:[#allocation4 + $0x5c]]
          %v661 = vstv %s659
          %v662 = vmul.f32 %v661, %v476
          %664 = vrot.lane.b32.xlu0 %v662, 32
          %v665 = vpop.permute.xlu0 %664
          %v666 = vrot.slane %v665, 7
          %v667 = vsel %vm527, %v666, %v665
          %v669 = vadd.f32 %v658, %v667
          %v670 = vstv %s660
          %v671 = vmul.f32 %v670, %v488
          %673 = vrot.lane.b32.xlu0 %v671, 32
          %v674 = vpop.permute.xlu0 %673
          %v675 = vrot.slane %v674, 7
          %v676 = vsel %vm527, %v675, %v674
          %v678 = vadd.f32 %v669, %v676
          %680 = vrot.lane.b32.xlu0 %v678, 50
          %v681 = vpop.permute.xlu0 %680
          %v682 = vrot.slane %v681, 1
          %vm683 = vcmask 408576
          %v684 = vsel %vm683, %v681, %v682
          %v686 = vmul.f32 %v550, %v684
          %v687 = vadd.f32 %v548, %v686
          %s688 = scalar_lea.vmem [#allocation8], 2
          %v689 = vld [vmem:[%s688] ss:$8 sm:$0x3]
          %s690 = sld [smem:[#allocation4 + $0x2]]
          %s691 = sld [smem:[#allocation4 + $0x33]]
          %v692 = vstv %s690
          %v693 = vmul.f32 %v692, %v401
          %v694 = vadd.f32 %v693, 0.0
          %v695 = vstv %s691
          %v696 = vmul.f32 %v695, %v406
          %v697 = vadd.f32 %v694, %v696
          %s698 = sld [smem:[#allocation4 + $0x9]]
          %s699 = sld [smem:[#allocation4 + $0x3a]]
          %v700 = vstv %s698
          %v701 = vmul.f32 %v700, %v401
          %703 = vrot.lane.b32.xlu0 %v701, 112
          %v704 = vpop.permute.xlu0 %703
          %v705 = vrot.slane %v704, 1
          %v706 = vsel %vm418, %v704, %v705
          %v708 = vadd.f32 %v697, %v706
          %v709 = vstv %s699
          %v710 = vmul.f32 %v709, %v406
          %712 = vrot.lane.b32.xlu0 %v710, 112
          %v713 = vpop.permute.xlu0 %712
          %v714 = vrot.slane %v713, 1
          %v715 = vsel %vm418, %v713, %v714
          %v717 = vadd.f32 %v708, %v715
          %s718 = sld [smem:[#allocation4 + $0x10]]
          %s719 = sld [smem:[#allocation4 + $0x41]]
          %v720 = vstv %s718
          %v721 = vmul.f32 %v720, %v401
          %723 = vrot.lane.b32.xlu0 %v721, 96
          %v724 = vpop.permute.xlu0 %723
          %v725 = vrot.slane %v724, 1
          %v726 = vsel %vm439, %v724, %v725
          %v728 = vadd.f32 %v717, %v726
          %v729 = vstv %s719
          %v730 = vmul.f32 %v729, %v406
          %732 = vrot.lane.b32.xlu0 %v730, 96
          %v733 = vpop.permute.xlu0 %732
          %v734 = vrot.slane %v733, 1
          %v735 = vsel %vm439, %v733, %v734
          %v737 = vadd.f32 %v728, %v735
          %s738 = sld [smem:[#allocation4 + $0x17]]
          %s739 = sld [smem:[#allocation4 + $0x48]]
          %v740 = vstv %s738
          %v741 = vmul.f32 %v740, %v401
          %743 = vrot.lane.b32.xlu0 %v741, 80
          %v744 = vpop.permute.xlu0 %743
          %v745 = vrot.slane %v744, 1
          %v746 = vsel %vm460, %v744, %v745
          %v748 = vadd.f32 %v737, %v746
          %v749 = vstv %s739
          %v750 = vmul.f32 %v749, %v406
          %752 = vrot.lane.b32.xlu0 %v750, 80
          %v753 = vpop.permute.xlu0 %752
          %v754 = vrot.slane %v753, 1
          %v755 = vsel %vm460, %v753, %v754
          %v757 = vadd.f32 %v748, %v755
          %s758 = sld [smem:[#allocation4 + $0x1e]]
          %s759 = sld [smem:[#allocation4 + $0x4f]]
          %v760 = vstv %s758
          %v761 = vmul.f32 %v760, %v476
          %763 = vrot.lane.b32.xlu0 %v761, 64
          %v764 = vpop.permute.xlu0 %763
          %v765 = vrot.slane %v764, 7
          %v766 = vsel %vm483, %v765, %v764
          %v768 = vadd.f32 %v757, %v766
          %v769 = vstv %s759
          %v770 = vmul.f32 %v769, %v488
          %772 = vrot.lane.b32.xlu0 %v770, 64
          %v773 = vpop.permute.xlu0 %772
          %v774 = vrot.slane %v773, 7
          %v775 = vsel %vm483, %v774, %v773
          %v777 = vadd.f32 %v768, %v775
          %s778 = sld [smem:[#allocation4 + $0x25]]
          %s779 = sld [smem:[#allocation4 + $0x56]]
          %v780 = vstv %s778
          %v781 = vmul.f32 %v780, %v476
          %783 = vrot.lane.b32.xlu0 %v781, 48
          %v784 = vpop.permute.xlu0 %783
          %v785 = vrot.slane %v784, 7
          %v786 = vsel %vm506, %v785, %v784
          %v788 = vadd.f32 %v777, %v786
          %v789 = vstv %s779
          %v790 = vmul.f32 %v789, %v488
          %792 = vrot.lane.b32.xlu0 %v790, 48
          %v793 = vpop.permute.xlu0 %792
          %v794 = vrot.slane %v793, 7
          %v795 = vsel %vm506, %v794, %v793
          %v797 = vadd.f32 %v788, %v795
          %s798 = sld [smem:[#allocation4 + $0x2c]]
          %s799 = sld [smem:[#allocation4 + $0x5d]]
          %v800 = vstv %s798
          %v801 = vmul.f32 %v800, %v476
          %803 = vrot.lane.b32.xlu0 %v801, 32
          %v804 = vpop.permute.xlu0 %803
          %v805 = vrot.slane %v804, 7
          %v806 = vsel %vm527, %v805, %v804
          %v808 = vadd.f32 %v797, %v806
          %v809 = vstv %s799
          %v810 = vmul.f32 %v809, %v488
          %812 = vrot.lane.b32.xlu0 %v810, 32
          %v813 = vpop.permute.xlu0 %812
          %v814 = vrot.slane %v813, 7
          %v815 = vsel %vm527, %v814, %v813
          %v817 = vadd.f32 %v808, %v815
          %819 = vrot.lane.b32.xlu0 %v817, 49
          %v820 = vpop.permute.xlu0 %819
          %v821 = vrot.slane %v820, 1
          %vm822 = vcmask 400384
          %v823 = vsel %vm822, %v820, %v821
          %v825 = vmul.f32 %v689, %v823
          %v826 = vadd.f32 %v687, %v825
          %s827 = scalar_lea.vmem [#allocation8], 3
          %v828 = vld [vmem:[%s827] ss:$8 sm:$0x3]
          %s829 = sld [smem:[#allocation4 + $0x3]]
          %s830 = sld [smem:[#allocation4 + $0x34]]
          %v831 = vstv %s829
          %v832 = vmul.f32 %v831, %v401
          %v833 = vadd.f32 %v832, 0.0
          %v834 = vstv %s830
          %v835 = vmul.f32 %v834, %v406
          %v836 = vadd.f32 %v833, %v835
          %s837 = sld [smem:[#allocation4 + $0xa]]
          %s838 = sld [smem:[#allocation4 + $0x3b]]
          %v839 = vstv %s837
          %v840 = vmul.f32 %v839, %v401
          %842 = vrot.lane.b32.xlu0 %v840, 112
          %v843 = vpop.permute.xlu0 %842
          %v844 = vrot.slane %v843, 1
          %v845 = vsel %vm418, %v843, %v844
          %v847 = vadd.f32 %v836, %v845
          %v848 = vstv %s838
          %v849 = vmul.f32 %v848, %v406
          %851 = vrot.lane.b32.xlu0 %v849, 112
          %v852 = vpop.permute.xlu0 %851
          %v853 = vrot.slane %v852, 1
          %v854 = vsel %vm418, %v852, %v853
          %v856 = vadd.f32 %v847, %v854
          %s857 = sld [smem:[#allocation4 + $0x11]]
          %s858 = sld [smem:[#allocation4 + $0x42]]
          %v859 = vstv %s857
          %v860 = vmul.f32 %v859, %v401
          %862 = vrot.lane.b32.xlu0 %v860, 96
          %v863 = vpop.permute.xlu0 %862
          %v864 = vrot.slane %v863, 1
          %v865 = vsel %vm439, %v863, %v864
          %v867 = vadd.f32 %v856, %v865
          %v868 = vstv %s858
          %v869 = vmul.f32 %v868, %v406
          %871 = vrot.lane.b32.xlu0 %v869, 96
          %v872 = vpop.permute.xlu0 %871
          %v873 = vrot.slane %v872, 1
          %v874 = vsel %vm439, %v872, %v873
          %v876 = vadd.f32 %v867, %v874
          %s877 = sld [smem:[#allocation4 + $0x18]]
          %s878 = sld [smem:[#allocation4 + $0x49]]
          %s879 = scalar_lea.vmem [#allocation3], 2
          %v880 = vld [vmem:[%s879] ss:$2 sm:$0x3]
          %v881 = vstv %s877
          %v882 = vmul.f32 %v881, %v880
          %884 = vrot.lane.b32.xlu0 %v882, 80
          %v885 = vpop.permute.xlu0 %884
          %v886 = vrot.slane %v885, 7
          %v887 = vsel %vm460, %v886, %v885
          %v889 = vadd.f32 %v876, %v887
          %s890 = scalar_lea.vmem [#allocation3], 3
          %v891 = vld [vmem:[%s890] ss:$2 sm:$0x3]
          %v892 = vstv %s878
          %v893 = vmul.f32 %v892, %v891
          %895 = vrot.lane.b32.xlu0 %v893, 80
          %v896 = vpop.permute.xlu0 %895
          %v897 = vrot.slane %v896, 7
          %v898 = vsel %vm460, %v897, %v896
          %v900 = vadd.f32 %v889, %v898
          %s901 = sld [smem:[#allocation4 + $0x1f]]
          %s902 = sld [smem:[#allocation4 + $0x50]]
          %v903 = vstv %s901
          %v904 = vmul.f32 %v903, %v476
          %906 = vrot.lane.b32.xlu0 %v904, 64
          %v907 = vpop.permute.xlu0 %906
          %v908 = vrot.slane %v907, 7
          %v909 = vsel %vm483, %v908, %v907
          %v911 = vadd.f32 %v900, %v909
          %v912 = vstv %s902
          %v913 = vmul.f32 %v912, %v488
          %915 = vrot.lane.b32.xlu0 %v913, 64
          %v916 = vpop.permute.xlu0 %915
          %v917 = vrot.slane %v916, 7
          %v918 = vsel %vm483, %v917, %v916
          %v920 = vadd.f32 %v911, %v918
          %s921 = sld [smem:[#allocation4 + $0x26]]
          %s922 = sld [smem:[#allocation4 + $0x57]]
          %v923 = vstv %s921
          %v924 = vmul.f32 %v923, %v476
          %926 = vrot.lane.b32.xlu0 %v924, 48
          %v927 = vpop.permute.xlu0 %926
          %v928 = vrot.slane %v927, 7
          %v929 = vsel %vm506, %v928, %v927
          %v931 = vadd.f32 %v920, %v929
          %v932 = vstv %s922
          %v933 = vmul.f32 %v932, %v488
          %935 = vrot.lane.b32.xlu0 %v933, 48
          %v936 = vpop.permute.xlu0 %935
          %v937 = vrot.slane %v936, 7
          %v938 = vsel %vm506, %v937, %v936
          %v940 = vadd.f32 %v931, %v938
          %s941 = sld [smem:[#allocation4 + $0x2d]]
          %s942 = sld [smem:[#allocation4 + $0x5e]]
          %v943 = vstv %s941
          %v944 = vmul.f32 %v943, %v476
          %946 = vrot.lane.b32.xlu0 %v944, 32
          %v947 = vpop.permute.xlu0 %946
          %v948 = vrot.slane %v947, 7
          %v949 = vsel %vm527, %v948, %v947
          %v951 = vadd.f32 %v940, %v949
          %v952 = vstv %s942
          %v953 = vmul.f32 %v952, %v488
          %955 = vrot.lane.b32.xlu0 %v953, 32
          %v956 = vpop.permute.xlu0 %955
          %v957 = vrot.slane %v956, 7
          %v958 = vsel %vm527, %v957, %v956
          %v960 = vadd.f32 %v951, %v958
          %962 = vrot.lane.b32.xlu0 %v960, 48
          %v963 = vpop.permute.xlu0 %962
          %v964 = vrot.slane %v963, 1
          %v965 = vsel %vm506, %v963, %v964
          %v967 = vmul.f32 %v828, %v965
          %v968 = vadd.f32 %v826, %v967
          %s969 = scalar_lea.vmem [#allocation8], 4
          %v970 = vld [vmem:[%s969] ss:$8 sm:$0x3]
          %s971 = sld [smem:[#allocation4 + $0x4]]
          %s972 = sld [smem:[#allocation4 + $0x35]]
          %v973 = vstv %s971
          %v974 = vmul.f32 %v973, %v401
          %v975 = vadd.f32 %v974, 0.0
          %v976 = vstv %s972
          %v977 = vmul.f32 %v976, %v406
          %v978 = vadd.f32 %v975, %v977
          %s979 = sld [smem:[#allocation4 + $0xb]]
          %s980 = sld [smem:[#allocation4 + $0x3c]]
          %v981 = vstv %s979
          %v982 = vmul.f32 %v981, %v401
          %984 = vrot.lane.b32.xlu0 %v982, 112
          %v985 = vpop.permute.xlu0 %984
          %v986 = vrot.slane %v985, 1
          %v987 = vsel %vm418, %v985, %v986
          %v989 = vadd.f32 %v978, %v987
          %v990 = vstv %s980
          %v991 = vmul.f32 %v990, %v406
          %993 = vrot.lane.b32.xlu0 %v991, 112
          %v994 = vpop.permute.xlu0 %993
          %v995 = vrot.slane %v994, 1
          %v996 = vsel %vm418, %v994, %v995
          %v998 = vadd.f32 %v989, %v996
          %s999 = sld [smem:[#allocation4 + $0x12]]
          %s1000 = sld [smem:[#allocation4 + $0x43]]
          %v1001 = vstv %s999
          %v1002 = vmul.f32 %v1001, %v401
          %1004 = vrot.lane.b32.xlu0 %v1002, 96
          %v1005 = vpop.permute.xlu0 %1004
          %v1006 = vrot.slane %v1005, 1
          %v1007 = vsel %vm439, %v1005, %v1006
          %v1009 = vadd.f32 %v998, %v1007
          %v1010 = vstv %s1000
          %v1011 = vmul.f32 %v1010, %v406
          %1013 = vrot.lane.b32.xlu0 %v1011, 96
          %v1014 = vpop.permute.xlu0 %1013
          %v1015 = vrot.slane %v1014, 1
          %v1016 = vsel %vm439, %v1014, %v1015
          %v1018 = vadd.f32 %v1009, %v1016
          %s1019 = sld [smem:[#allocation4 + $0x19]]
          %s1020 = sld [smem:[#allocation4 + $0x4a]]
          %v1021 = vstv %s1019
          %v1022 = vmul.f32 %v1021, %v476
          %1024 = vrot.lane.b32.xlu0 %v1022, 80
          %v1025 = vpop.permute.xlu0 %1024
          %v1026 = vrot.slane %v1025, 7
          %v1027 = vsel %vm460, %v1026, %v1025
          %v1029 = vadd.f32 %v1018, %v1027
          %v1030 = vstv %s1020
          %v1031 = vmul.f32 %v1030, %v488
          %1033 = vrot.lane.b32.xlu0 %v1031, 80
          %v1034 = vpop.permute.xlu0 %1033
          %v1035 = vrot.slane %v1034, 7
          %v1036 = vsel %vm460, %v1035, %v1034
          %v1038 = vadd.f32 %v1029, %v1036
          %s1039 = sld [smem:[#allocation4 + $0x20]]
          %s1040 = sld [smem:[#allocation4 + $0x51]]
          %v1041 = vstv %s1039
          %v1042 = vmul.f32 %v1041, %v476
          %1044 = vrot.lane.b32.xlu0 %v1042, 64
          %v1045 = vpop.permute.xlu0 %1044
          %v1046 = vrot.slane %v1045, 7
          %v1047 = vsel %vm483, %v1046, %v1045
          %v1049 = vadd.f32 %v1038, %v1047
          %v1050 = vstv %s1040
          %v1051 = vmul.f32 %v1050, %v488
          %1053 = vrot.lane.b32.xlu0 %v1051, 64
          %v1054 = vpop.permute.xlu0 %1053
          %v1055 = vrot.slane %v1054, 7
          %v1056 = vsel %vm483, %v1055, %v1054
          %v1058 = vadd.f32 %v1049, %v1056
          %s1059 = sld [smem:[#allocation4 + $0x27]]
          %s1060 = sld [smem:[#allocation4 + $0x58]]
          %v1061 = vstv %s1059
          %v1062 = vmul.f32 %v1061, %v476
          %1064 = vrot.lane.b32.xlu0 %v1062, 48
          %v1065 = vpop.permute.xlu0 %1064
          %v1066 = vrot.slane %v1065, 7
          %v1067 = vsel %vm506, %v1066, %v1065
          %v1069 = vadd.f32 %v1058, %v1067
          %v1070 = vstv %s1060
          %v1071 = vmul.f32 %v1070, %v488
          %1073 = vrot.lane.b32.xlu0 %v1071, 48
          %v1074 = vpop.permute.xlu0 %1073
          %v1075 = vrot.slane %v1074, 7
          %v1076 = vsel %vm506, %v1075, %v1074
          %v1078 = vadd.f32 %v1069, %v1076
          %s1079 = sld [smem:[#allocation4 + $0x2e]]
          %s1080 = sld [smem:[#allocation4 + $0x5f]]
          %v1081 = vstv %s1079
          %v1082 = vmul.f32 %v1081, %v476
          %1084 = vrot.lane.b32.xlu0 %v1082, 32
          %v1085 = vpop.permute.xlu0 %1084
          %v1086 = vrot.slane %v1085, 7
          %v1087 = vsel %vm527, %v1086, %v1085
          %v1089 = vadd.f32 %v1078, %v1087
          %v1090 = vstv %s1080
          %v1091 = vmul.f32 %v1090, %v488
          %1093 = vrot.lane.b32.xlu0 %v1091, 32
          %v1094 = vpop.permute.xlu0 %1093
          %v1095 = vrot.slane %v1094, 7
          %v1096 = vsel %vm527, %v1095, %v1094
          %v1098 = vadd.f32 %v1089, %v1096
          %1100 = vrot.lane.b32.xlu0 %v1098, 47
          %v1101 = vpop.permute.xlu0 %1100
          %v1102 = vrot.slane %v1101, 1
          %vm1103 = vcmask 384000
          %v1104 = vsel %vm1103, %v1101, %v1102
          %v1106 = vmul.f32 %v970, %v1104
          %v1107 = vadd.f32 %v968, %v1106
          %s1108 = scalar_lea.vmem [#allocation8], 5
          %v1109 = vld [vmem:[%s1108] ss:$8 sm:$0x3]
          %s1110 = sld [smem:[#allocation4 + $0x5]]
          %s1111 = sld [smem:[#allocation4 + $0x36]]
          %v1112 = vstv %s1110
          %v1113 = vmul.f32 %v1112, %v401
          %v1114 = vadd.f32 %v1113, 0.0
          %v1115 = vstv %s1111
          %v1116 = vmul.f32 %v1115, %v406
          %v1117 = vadd.f32 %v1114, %v1116
          %s1118 = sld [smem:[#allocation4 + $0xc]]
          %s1119 = sld [smem:[#allocation4 + $0x3d]]
          %v1120 = vstv %s1118
          %v1121 = vmul.f32 %v1120, %v401
          %1123 = vrot.lane.b32.xlu0 %v1121, 112
          %v1124 = vpop.permute.xlu0 %1123
          %v1125 = vrot.slane %v1124, 1
          %v1126 = vsel %vm418, %v1124, %v1125
          %v1128 = vadd.f32 %v1117, %v1126
          %v1129 = vstv %s1119
          %v1130 = vmul.f32 %v1129, %v406
          %1132 = vrot.lane.b32.xlu0 %v1130, 112
          %v1133 = vpop.permute.xlu0 %1132
          %v1134 = vrot.slane %v1133, 1
          %v1135 = vsel %vm418, %v1133, %v1134
          %v1137 = vadd.f32 %v1128, %v1135
          %s1138 = sld [smem:[#allocation4 + $0x13]]
          %s1139 = sld [smem:[#allocation4 + $0x44]]
          %v1140 = vstv %s1138
          %v1141 = vmul.f32 %v1140, %v401
          %1143 = vrot.lane.b32.xlu0 %v1141, 96
          %v1144 = vpop.permute.xlu0 %1143
          %v1145 = vrot.slane %v1144, 1
          %v1146 = vsel %vm439, %v1144, %v1145
          %v1148 = vadd.f32 %v1137, %v1146
          %v1149 = vstv %s1139
          %v1150 = vmul.f32 %v1149, %v406
          %1152 = vrot.lane.b32.xlu0 %v1150, 96
          %v1153 = vpop.permute.xlu0 %1152
          %v1154 = vrot.slane %v1153, 1
          %v1155 = vsel %vm439, %v1153, %v1154
          %v1157 = vadd.f32 %v1148, %v1155
          %s1158 = sld [smem:[#allocation4 + $0x1a]]
          %s1159 = sld [smem:[#allocation4 + $0x4b]]
          %v1160 = vstv %s1158
          %v1161 = vmul.f32 %v1160, %v476
          %1163 = vrot.lane.b32.xlu0 %v1161, 80
          %v1164 = vpop.permute.xlu0 %1163
          %v1165 = vrot.slane %v1164, 7
          %v1166 = vsel %vm460, %v1165, %v1164
          %v1168 = vadd.f32 %v1157, %v1166
          %v1169 = vstv %s1159
          %v1170 = vmul.f32 %v1169, %v488
          %1172 = vrot.lane.b32.xlu0 %v1170, 80
          %v1173 = vpop.permute.xlu0 %1172
          %v1174 = vrot.slane %v1173, 7
          %v1175 = vsel %vm460, %v1174, %v1173
          %v1177 = vadd.f32 %v1168, %v1175
          %s1178 = sld [smem:[#allocation4 + $0x21]]
          %s1179 = sld [smem:[#allocation4 + $0x52]]
          %v1180 = vstv %s1178
          %v1181 = vmul.f32 %v1180, %v476
          %1183 = vrot.lane.b32.xlu0 %v1181, 64
          %v1184 = vpop.permute.xlu0 %1183
          %v1185 = vrot.slane %v1184, 7
          %v1186 = vsel %vm483, %v1185, %v1184
          %v1188 = vadd.f32 %v1177, %v1186
          %v1189 = vstv %s1179
          %v1190 = vmul.f32 %v1189, %v488
          %1192 = vrot.lane.b32.xlu0 %v1190, 64
          %v1193 = vpop.permute.xlu0 %1192
          %v1194 = vrot.slane %v1193, 7
          %v1195 = vsel %vm483, %v1194, %v1193
          %v1197 = vadd.f32 %v1188, %v1195
          %s1198 = sld [smem:[#allocation4 + $0x28]]
          %s1199 = sld [smem:[#allocation4 + $0x59]]
          %v1200 = vstv %s1198
          %v1201 = vmul.f32 %v1200, %v476
          %1203 = vrot.lane.b32.xlu0 %v1201, 48
          %v1204 = vpop.permute.xlu0 %1203
          %v1205 = vrot.slane %v1204, 7
          %v1206 = vsel %vm506, %v1205, %v1204
          %v1208 = vadd.f32 %v1197, %v1206
          %v1209 = vstv %s1199
          %v1210 = vmul.f32 %v1209, %v488
          %1212 = vrot.lane.b32.xlu0 %v1210, 48
          %v1213 = vpop.permute.xlu0 %1212
          %v1214 = vrot.slane %v1213, 7
          %v1215 = vsel %vm506, %v1214, %v1213
          %v1217 = vadd.f32 %v1208, %v1215
          %s1218 = sld [smem:[#allocation4 + $0x2f]]
          %s1219 = sld [smem:[#allocation4 + $0x60]]
          %v1220 = vstv %s1218
          %v1221 = vmul.f32 %v1220, %v476
          %1223 = vrot.lane.b32.xlu0 %v1221, 32
          %v1224 = vpop.permute.xlu0 %1223
          %v1225 = vrot.slane %v1224, 7
          %v1226 = vsel %vm527, %v1225, %v1224
          %v1228 = vadd.f32 %v1217, %v1226
          %v1229 = vstv %s1219
          %v1230 = vmul.f32 %v1229, %v488
          %1232 = vrot.lane.b32.xlu0 %v1230, 32
          %v1233 = vpop.permute.xlu0 %1232
          %v1234 = vrot.slane %v1233, 7
          %v1235 = vsel %vm527, %v1234, %v1233
          %v1237 = vadd.f32 %v1228, %v1235
          %1239 = vrot.lane.b32.xlu0 %v1237, 46
          %v1240 = vpop.permute.xlu0 %1239
          %v1241 = vrot.slane %v1240, 1
          %vm1242 = vcmask 375808
          %v1243 = vsel %vm1242, %v1240, %v1241
          %v1245 = vmul.f32 %v1109, %v1243
          %v1246 = vadd.f32 %v1107, %v1245
          %s1247 = scalar_lea.vmem [#allocation8], 6
          %v1248 = vld [vmem:[%s1247] ss:$8 sm:$0x3]
          %s1249 = sld [smem:[#allocation4 + $0x6]]
          %s1250 = sld [smem:[#allocation4 + $0x37]]
          %v1251 = vstv %s1249
          %v1252 = vmul.f32 %v1251, %v401
          %v1253 = vadd.f32 %v1252, 0.0
          %v1254 = vstv %s1250
          %v1255 = vmul.f32 %v1254, %v406
          %v1256 = vadd.f32 %v1253, %v1255
          %s1257 = sld [smem:[#allocation4 + $0xd]]
          %s1258 = sld [smem:[#allocation4 + $0x3e]]
          %v1259 = vstv %s1257
          %v1260 = vmul.f32 %v1259, %v401
          %1262 = vrot.lane.b32.xlu0 %v1260, 112
          %v1263 = vpop.permute.xlu0 %1262
          %v1264 = vrot.slane %v1263, 1
          %v1265 = vsel %vm418, %v1263, %v1264
          %v1267 = vadd.f32 %v1256, %v1265
          %v1268 = vstv %s1258
          %v1269 = vmul.f32 %v1268, %v406
          %1271 = vrot.lane.b32.xlu0 %v1269, 112
          %v1272 = vpop.permute.xlu0 %1271
          %v1273 = vrot.slane %v1272, 1
          %v1274 = vsel %vm418, %v1272, %v1273
          %v1276 = vadd.f32 %v1267, %v1274
          %s1277 = sld [smem:[#allocation4 + $0x14]]
          %s1278 = sld [smem:[#allocation4 + $0x45]]
          %v1279 = vstv %s1277
          %v1280 = vmul.f32 %v1279, %v401
          %1282 = vrot.lane.b32.xlu0 %v1280, 96
          %v1283 = vpop.permute.xlu0 %1282
          %v1284 = vrot.slane %v1283, 1
          %v1285 = vsel %vm439, %v1283, %v1284
          %v1287 = vadd.f32 %v1276, %v1285
          %v1288 = vstv %s1278
          %v1289 = vmul.f32 %v1288, %v406
          %1291 = vrot.lane.b32.xlu0 %v1289, 96
          %v1292 = vpop.permute.xlu0 %1291
          %v1293 = vrot.slane %v1292, 1
          %v1294 = vsel %vm439, %v1292, %v1293
          %v1296 = vadd.f32 %v1287, %v1294
          %s1297 = sld [smem:[#allocation4 + $0x1b]]
          %s1298 = sld [smem:[#allocation4 + $0x4c]]
          %v1299 = vstv %s1297
          %v1300 = vmul.f32 %v1299, %v476
          %1302 = vrot.lane.b32.xlu0 %v1300, 80
          %v1303 = vpop.permute.xlu0 %1302
          %v1304 = vrot.slane %v1303, 7
          %v1305 = vsel %vm460, %v1304, %v1303
          %v1307 = vadd.f32 %v1296, %v1305
          %v1308 = vstv %s1298
          %v1309 = vmul.f32 %v1308, %v488
          %1311 = vrot.lane.b32.xlu0 %v1309, 80
          %v1312 = vpop.permute.xlu0 %1311
          %v1313 = vrot.slane %v1312, 7
          %v1314 = vsel %vm460, %v1313, %v1312
          %v1316 = vadd.f32 %v1307, %v1314
          %s1317 = sld [smem:[#allocation4 + $0x22]]
          %s1318 = sld [smem:[#allocation4 + $0x53]]
          %v1319 = vstv %s1317
          %v1320 = vmul.f32 %v1319, %v476
          %1322 = vrot.lane.b32.xlu0 %v1320, 64
          %v1323 = vpop.permute.xlu0 %1322
          %v1324 = vrot.slane %v1323, 7
          %v1325 = vsel %vm483, %v1324, %v1323
          %v1327 = vadd.f32 %v1316, %v1325
          %v1328 = vstv %s1318
          %v1329 = vmul.f32 %v1328, %v488
          %1331 = vrot.lane.b32.xlu0 %v1329, 64
          %v1332 = vpop.permute.xlu0 %1331
          %v1333 = vrot.slane %v1332, 7
          %v1334 = vsel %vm483, %v1333, %v1332
          %v1336 = vadd.f32 %v1327, %v1334
          %s1337 = sld [smem:[#allocation4 + $0x29]]
          %s1338 = sld [smem:[#allocation4 + $0x5a]]
          %v1339 = vstv %s1337
          %v1340 = vmul.f32 %v1339, %v476
          %1342 = vrot.lane.b32.xlu0 %v1340, 48
          %v1343 = vpop.permute.xlu0 %1342
          %v1344 = vrot.slane %v1343, 7
          %v1345 = vsel %vm506, %v1344, %v1343
          %v1347 = vadd.f32 %v1336, %v1345
          %v1348 = vstv %s1338
          %v1349 = vmul.f32 %v1348, %v488
          %1351 = vrot.lane.b32.xlu0 %v1349, 48
          %v1352 = vpop.permute.xlu0 %1351
          %v1353 = vrot.slane %v1352, 7
          %v1354 = vsel %vm506, %v1353, %v1352
          %v1356 = vadd.f32 %v1347, %v1354
          %s1357 = sld [smem:[#allocation4 + $0x30]]
          %s1358 = sld [smem:[#allocation4 + $0x61]]
          %v1359 = vstv %s1357
          %v1360 = vmul.f32 %v1359, %v476
          %1362 = vrot.lane.b32.xlu0 %v1360, 32
          %v1363 = vpop.permute.xlu0 %1362
          %v1364 = vrot.slane %v1363, 7
          %v1365 = vsel %vm527, %v1364, %v1363
          %v1367 = vadd.f32 %v1356, %v1365
          %v1368 = vstv %s1358
          %v1369 = vmul.f32 %v1368, %v488
          %1371 = vrot.lane.b32.xlu0 %v1369, 32
          %v1372 = vpop.permute.xlu0 %1371
          %v1373 = vrot.slane %v1372, 7
          %v1374 = vsel %vm527, %v1373, %v1372
          %v1376 = vadd.f32 %v1367, %v1374
          %1378 = vrot.lane.b32.xlu0 %v1376, 45
          %v1379 = vpop.permute.xlu0 %1378
          %v1380 = vrot.slane %v1379, 1
          %vm1381 = vcmask 367616
          %v1382 = vsel %vm1381, %v1379, %v1380
          %v1384 = vmul.f32 %v1248, %v1382
          %v1385 = vadd.f32 %v1246, %v1384
          %v1386 = vxor.u32 %v1385, 2147483648
          %v1387 = vmul.f32 %v1386, 1.442695
          %v1388 = vpow.pop %v1387
          %v1389 = vadd.f32 %v1388, 1.0
          %v1390 = vrcp.pop %v1389
          %v1391 = vmul.f32 1.0, %v1390
          %v1392 = vlaneseq
          %vm1393 = vcmp.ge.s32.totalorder %v1392, 0
          %vm1394 = vcmp.lt.s32.totalorder %v1392, 256
          %vm1395 = vmand %vm1393, %vm1394
          %1396 = vst.msk [vmem:[%s227] sm:$0x3] %vm1395, %v1391
        $region56: #{tpu_custom_call.1} parent=31 // pred_fallthru
          _
        %s1397 = sand.u32 %s112, 1
        %s1398 = scalar_lea.sflag [#allocation6], %s1397
        %s1399 = sand.u32 %s112, 1
        %s1400 = smul.addr %s1399, 2
        %s1401 = scalar_lea.vmem [#allocation11], %s1400
        // Predicated region
        $region57: #{tpu_custom_call.1} parent=31 // pred_check
          %p1402 = pneg %p122
        $region58: #{tpu_custom_call.1} parent=31 // pred_check_branch
          %1404 = sbr.rel (%p1402) target = $region60
        $region59: #{tpu_custom_call.1} parent=31 // pred_region
          %s1406 = ssub.s32 32, 32
          %1407 = vsyncadd %s1398, %s1406
          %s1408 = smul.addr %s26, 2
          %s1409 = smul.addr %s1408, 16
          %s1410 = scalar_lea.hbm %s3, %s1409
          %s1412 = sshll.u32 %s1401, 4
          %s1413 = int_to_ptr.vmem [resolvable:$true] %s1412
          %1415 = dma.vmem_to_hbm [thread:$0]  %s1413, 32, %s1410, %s1398
        $region60: #{tpu_custom_call.1} parent=31 // pred_fallthru
          _
      $region32: #{tpu_custom_call.1} parent=5 // pred_fallthru
        _
      %p1416 = scmp.le.s32.totalorder 2, %s17
      // Predicated region
      $region61: #{tpu_custom_call.1} parent=5 // pred_check
        %p1417 = pneg %p1416
      $region62: #{tpu_custom_call.1} parent=5 // pred_check_branch
        %1419 = sbr.rel (%p1417) target = $region64
      $region63: #{tpu_custom_call.1} parent=5 // pred_region
        %s1420 = ssub.s32 %s17, 2
        // Predicated region
        $region65: #{tpu_custom_call.1} parent=63 // pred_check
          %p1421 = pneg %p128
        $region66: #{tpu_custom_call.1} parent=63 // pred_check_branch
          %1423 = sbr.rel (%p1421) target = $region68
        $region67: #{tpu_custom_call.1} parent=63 // pred_region
          %s1424 = sand.u32 %s113, 1
          %s1425 = scalar_lea.sflag [#allocation6], %s1424
          %s1426 = sand.u32 %s113, 1
          %s1427 = smul.addr %s1426, 2
          %s1428 = scalar_lea.vmem [#allocation11], %s1427
          %1429 = dma.done %s1425, 32
        $region68: #{tpu_custom_call.1} parent=63 // pred_fallthru
          _
      $region64: #{tpu_custom_call.1} parent=5 // pred_fallthru
        _
    $region6: #{tpu_custom_call.1} parent=1 // loop_footer
      %s21 = sadd.s32 1, %s17
    $region7: #{tpu_custom_call.1} parent=1 // loop_footer_branch
      %16 = sbr.rel target = $region3
    $region8: #{tpu_custom_call.1} parent=1 // loop_exit
      _
    %1430 = vsyncpa [#allocation5], 1
    %s1431 = scalar_lea.sflag [#allocation5], 1
    %1432 = vsyncpa %s1431, 1
    %1433 = vsyncpa [#allocation10], 1
    %s1434 = scalar_lea.sflag [#allocation10], 1
    %1435 = vsyncpa %s1434, 1
    %1436 = vsyncpa [#allocation6], 1
    %s1437 = scalar_lea.sflag [#allocation6], 1
    %1438 = vsyncpa %s1437, 1
    %1439 = vsyncpa [#allocation7], 1
    %s1440 = scalar_lea.sflag [#allocation7], 1
    %1441 = vsyncpa %s1440, 1

</llo_original>
